<compile_context>
chip_gen: v5e
topology: v5e:2x2
jax: 0.10.0
libtpu: 0.0.40
codegen_flags: <defaults>
</compile_context>

<pallas_src>
import functools

import jax
import jax.numpy as jnp
import numpy as np
from jax.experimental import pallas as pl
from jax.experimental.pallas import tpu as pltpu

# ---- logical model dimensions (from the module's __init__ / forward) --------
D_IN = 768     # sensor length (x viewed as (B, 1, 768, 1))
D_ENC = 300    # Discriminator(n_out_linear=300) output
D_H1 = 250     # fc1: Linear(300, 250)
D_Z = 200      # fc21/fc22: Linear(250, 200) -> mu, logvar, z
D_OUT = 768    # Generator output (sensor reconstruction), stand-in length

# ---- lane-aligned (128-multiple) padded dims used inside the kernel ---------
DP_ENC = 384          # 300 -> 384
DP_H1 = 256           # 250 -> 256
DP_Z = 256            # 200 -> 256
DP_MULV = 2 * DP_Z    # fused [mu | logvar] slab -> 512 (lane-dense output)

_BF16 = jnp.bfloat16


def _vae_kernel(x_ref, eps_ref,
                w_enc_ref, b_enc_ref,
                w1_ref, b1_ref,
                w_mulv_ref, b_mulv_ref,
                w_dec_ref, b_dec_ref,
                out_ref, mulv_ref):
    # bf16 operands feed the MXU natively (v6e/v7x); accumulation stays f32.
    x = x_ref[...].astype(_BF16)                                     # (bm, 768)

    # encoder stand-in (Discriminator -> 300 features, zero-padded to 384)
    enc = jnp.dot(x, w_enc_ref[...], preferred_element_type=jnp.float32)
    enc = enc + b_enc_ref[...]
    # TODO(synk): real Discriminator conv stack; LeakyReLU slope 0.2 (PGAN default).
    enc = jnp.where(enc > 0, enc, 0.2 * enc)      # padded cols stay exactly 0

    # fc1: Linear(300, 250), padded to (384, 256)
    h1 = jnp.dot(enc.astype(_BF16), w1_ref[...],
                 preferred_element_type=jnp.float32) + b1_ref[...]

    # fused fc21 | fc22: one (256, 512) matmul -> lane-dense [mu | logvar] slab
    mulv = jnp.dot(h1.astype(_BF16), w_mulv_ref[...],
                   preferred_element_type=jnp.float32) + b_mulv_ref[...]
    mu = mulv[:, :DP_Z]          # (bm, 256); cols 200..255 are zero
    logvar = mulv[:, DP_Z:]      # (bm, 256); cols 200..255 are zero

    # reparameterize: z = mu + eps * exp(0.5 * logvar); eps padded cols are 0,
    # so padded z cols stay 0 and do not touch the decoder result.
    z = mu + eps_ref[...] * jnp.exp(0.5 * logvar)

    # decoder stand-in (Generator: z -> reconstructed sensor), padded (256, 768)
    dec = jnp.dot(z.astype(_BF16), w_dec_ref[...],
                  preferred_element_type=jnp.float32) + b_dec_ref[...]
    out_ref[...] = jnp.tanh(dec)

    # single lane-dense (bm, 512) store; wrapper slices mu / logvar out of it.
    mulv_ref[...] = mulv


@functools.partial(jax.jit, static_argnames=("bm",))
def _forward_impl(x, eps, params, *, bm):
    B = x.shape[0]
    (w_enc, b_enc, w1, b1, w_mulv, b_mulv, w_dec, b_dec) = params

    # pad eps into the lane-aligned z width and pad batch to a multiple of bm
    Bp = pl.cdiv(B, bm) * bm
    eps_p = jnp.zeros((Bp, DP_Z), jnp.float32).at[:B, :D_Z].set(eps)
    x_p = x if Bp == B else jnp.pad(x, ((0, Bp - B), (0, 0)))

    batch_spec = lambda d: pl.BlockSpec((bm, d), lambda i: (i, 0))
    full_spec = lambda a: pl.BlockSpec(a.shape, lambda i: (0,) * a.ndim)

    out, mulv = pl.pallas_call(
        _vae_kernel,
        out_shape=[
            jax.ShapeDtypeStruct((Bp, D_OUT), jnp.float32),
            jax.ShapeDtypeStruct((Bp, DP_MULV), jnp.float32),
        ],
        grid_spec=pltpu.PrefetchScalarGridSpec(
            num_scalar_prefetch=0,
            grid=(Bp // bm,),
            in_specs=[
                batch_spec(D_IN),          # x
                batch_spec(DP_Z),          # eps (zero-padded to 256)
                full_spec(w_enc), full_spec(b_enc),
                full_spec(w1), full_spec(b1),
                full_spec(w_mulv), full_spec(b_mulv),
                full_spec(w_dec), full_spec(b_dec),
            ],
            out_specs=[
                batch_spec(D_OUT),         # reconstruction (768: lane-dense)
                batch_spec(DP_MULV),       # [mu | logvar] slab (512: lane-dense)
            ],
        ),
        compiler_params=pltpu.CompilerParams(
            dimension_semantics=("parallel",),
            # headroom so large bm tiles also fit v5e's 16 MiB scoped default
            vmem_limit_bytes=64 << 20,
        ),
    )(x_p, eps_p, w_enc, b_enc, w1, b1, w_mulv, b_mulv, w_dec, b_dec)

    mu = mulv[:B, :D_Z]
    logvar = mulv[:B, DP_Z:DP_Z + D_Z]
    return out[:B], mu, logvar


def sensor_to_sensor_forward(x, eps, params):
    """Returns (out, mu, logvar), matching SensorToSensor.forward()."""
    B = x.shape[0]
    # Whole batch in one block when small (latency-bound); otherwise 256-row
    # tiles so the MXU M dimension is full and, for B >= 512, the grid has
    # >= 2 "parallel" steps to shard across v7x's two TensorCores.
    bm = B if B <= 256 else 256
    return _forward_impl(x, eps, params, bm=bm)


def init_params(key):
    """Deterministic nn.Linear-style init (uniform +-1/sqrt(fan_in)), stored as
    (in, out) so the kernel computes y = x @ W + b, zero-padded to lane-aligned
    shapes and cast to bf16 (weights); biases stay f32 for the f32 adds."""
    ks = jax.random.split(key, 10)

    def lin(kw, kb, d_in, d_out):
        scale = 1.0 / jnp.sqrt(jnp.float32(d_in))
        w = jax.random.uniform(kw, (d_in, d_out), jnp.float32, -scale, scale)
        b = jax.random.uniform(kb, (d_out,), jnp.float32, -scale, scale)
        return w, b

    w_enc, b_enc = lin(ks[0], ks[1], D_IN, D_ENC)   # encoder stand-in
    w1, b1 = lin(ks[2], ks[3], D_ENC, D_H1)         # fc1
    w21, b21 = lin(ks[4], ks[5], D_H1, D_Z)         # fc21 (mu)
    w22, b22 = lin(ks[6], ks[7], D_H1, D_Z)         # fc22 (logvar)
    w_dec, b_dec = lin(ks[8], ks[9], D_Z, D_OUT)    # decoder stand-in

    def pad_w(w, p_in, p_out):
        out = jnp.zeros((p_in, p_out), jnp.float32)
        return out.at[:w.shape[0], :w.shape[1]].set(w)

    def pad_b(b, p_out):
        return jnp.zeros((1, p_out), jnp.float32).at[0, :b.shape[0]].set(b)

    # fused [fc21 | fc22] weight/bias; each half padded to DP_Z lanes with
    # zeros so the sliced mu/logvar are unaffected by the padding region.
    w_mulv = jnp.zeros((DP_H1, DP_MULV), jnp.float32)
    w_mulv = w_mulv.at[:D_H1, :D_Z].set(w21)
    w_mulv = w_mulv.at[:D_H1, DP_Z:DP_Z + D_Z].set(w22)
    b_mulv = jnp.zeros((1, DP_MULV), jnp.float32)
    b_mulv = b_mulv.at[0, :D_Z].set(b21)
    b_mulv = b_mulv.at[0, DP_Z:DP_Z + D_Z].set(b22)

    return (
        pad_w(w_enc, D_IN, DP_ENC).astype(_BF16), pad_b(b_enc, DP_ENC),
        pad_w(w1, DP_ENC, DP_H1).astype(_BF16), pad_b(b1, DP_H1),
        w_mulv.astype(_BF16), b_mulv,
        pad_w(w_dec, DP_Z, D_OUT).astype(_BF16), pad_b(b_dec, D_OUT),
    )


def _reference_forward(x, eps, params):
    """Pure-JAX reference with identical dtype handling (bf16 ops, f32 accum)."""
    (w_enc, b_enc, w1, b1, w_mulv, b_mulv, w_dec, b_dec) = params
    c = lambda a: a.astype(_BF16)
    enc = jnp.dot(c(x), w_enc, preferred_element_type=jnp.float32) + b_enc
    enc = jnp.where(enc > 0, enc, 0.2 * enc)
    h1 = jnp.dot(c(enc), w1, preferred_element_type=jnp.float32) + b1
    mulv = jnp.dot(c(h1), w_mulv, preferred_element_type=jnp.float32) + b_mulv
    mu, logvar = mulv[:, :DP_Z], mulv[:, DP_Z:]
    eps_p = jnp.zeros((x.shape[0], DP_Z), jnp.float32).at[:, :D_Z].set(eps)
    z = mu + eps_p * jnp.exp(0.5 * logvar)
    dec = jnp.dot(c(z), w_dec, preferred_element_type=jnp.float32) + b_dec
    return jnp.tanh(dec), mu[:, :D_Z], logvar[:, :D_Z]


if __name__ == "__main__":
    key = jax.random.PRNGKey(0)
    k_params, k_x, k_eps = jax.random.split(key, 3)

    B = 8
    params = init_params(k_params)
    x = jax.random.normal(k_x, (B, D_IN), jnp.float32)
    # eps for reparameterize (torch.randn_like(std) equivalent, drawn outside)
    eps = jax.random.normal(k_eps, (B, D_Z), jnp.float32)

    out, mu, logvar = sensor_to_sensor_forward(x, eps, params)
    jax.block_until_ready((out, mu, logvar))

    assert out.shape == (B, D_OUT)
    assert mu.shape == (B, D_Z)
    assert logvar.shape == (B, D_Z)

    ref_out, ref_mu, ref_logvar = _reference_forward(x, eps, params)
    np.testing.assert_allclose(np.asarray(out), np.asarray(ref_out),
                               atol=2e-2, rtol=2e-2)
    np.testing.assert_allclose(np.asarray(mu), np.asarray(ref_mu),
                               atol=2e-2, rtol=2e-2)
    np.testing.assert_allclose(np.asarray(logvar), np.asarray(ref_logvar),
                               atol=2e-2, rtol=2e-2)

    print("KERNEL_OK")
</pallas_src>

<mosaic_0001>
module attributes {stable_mosaic.version = 11 : i64} {
  func.func @_vae_kernel(%arg0: i32, %arg1: memref<8x768xf32, #tpu.memory_space<vmem>>, %arg2: memref<8x256xf32, #tpu.memory_space<vmem>>, %arg3: memref<768x384xbf16, #tpu.memory_space<vmem>>, %arg4: memref<1x384xf32, #tpu.memory_space<vmem>>, %arg5: memref<384x256xbf16, #tpu.memory_space<vmem>>, %arg6: memref<1x256xf32, #tpu.memory_space<vmem>>, %arg7: memref<256x512xbf16, #tpu.memory_space<vmem>>, %arg8: memref<1x512xf32, #tpu.memory_space<vmem>>, %arg9: memref<256x768xbf16, #tpu.memory_space<vmem>>, %arg10: memref<1x768xf32, #tpu.memory_space<vmem>>, %arg11: memref<8x768xf32, #tpu.memory_space<vmem>>, %arg12: memref<8x512xf32, #tpu.memory_space<vmem>>) attributes {dimension_semantics = [#tpu.dimension_semantics<parallel>], iteration_bounds = array<i64: 1>, scalar_prefetch = 0 : i64, scratch_operands = 0 : i64, tpu.core_type = #tpu.core_type<tc>, window_params = [{transform_indices = @transform_0, window_bounds = array<i64: 8, 768>}, {transform_indices = @transform_1, window_bounds = array<i64: 8, 256>}, {pipeline_mode = #tpu.pipeline_mode<synchronous>, transform_indices = @transform_2, window_bounds = array<i64: 768, 384>}, {pipeline_mode = #tpu.pipeline_mode<synchronous>, transform_indices = @transform_3, window_bounds = array<i64: 1, 384>}, {pipeline_mode = #tpu.pipeline_mode<synchronous>, transform_indices = @transform_4, window_bounds = array<i64: 384, 256>}, {pipeline_mode = #tpu.pipeline_mode<synchronous>, transform_indices = @transform_5, window_bounds = array<i64: 1, 256>}, {pipeline_mode = #tpu.pipeline_mode<synchronous>, transform_indices = @transform_6, window_bounds = array<i64: 256, 512>}, {pipeline_mode = #tpu.pipeline_mode<synchronous>, transform_indices = @transform_7, window_bounds = array<i64: 1, 512>}, {pipeline_mode = #tpu.pipeline_mode<synchronous>, transform_indices = @transform_8, window_bounds = array<i64: 256, 768>}, {pipeline_mode = #tpu.pipeline_mode<synchronous>, transform_indices = @transform_9, window_bounds = array<i64: 1, 768>}, {transform_indices = @transform_10, window_bounds = array<i64: 8, 768>}, {transform_indices = @transform_11, window_bounds = array<i64: 8, 512>}]} {
    %c0 = arith.constant 0 : index
    %c0_0 = arith.constant 0 : index
    %0 = vector.load %arg1[%c0, %c0_0] : memref<8x768xf32, #tpu.memory_space<vmem>>, vector<8x768xf32>
    %1 = arith.truncf %0 : vector<8x768xf32> to vector<8x768xbf16>
    %c0_1 = arith.constant 0 : index
    %c0_2 = arith.constant 0 : index
    %2 = vector.load %arg3[%c0_1, %c0_2] : memref<768x384xbf16, #tpu.memory_space<vmem>>, vector<768x384xbf16>
    %cst = arith.constant dense<0.000000e+00> : vector<8x384xf32>
    %3 = tpu.matmul %1, %2, %cst {dimension_numbers = #tpu.dot_dimension_numbers<[1], [0], [0], [1], [0, 0, 1, 1], [], []>} : vector<8x768xbf16>, vector<768x384xbf16>, vector<8x384xf32> -> vector<8x384xf32>
    %c0_3 = arith.constant 0 : index
    %c0_4 = arith.constant 0 : index
    %4 = vector.load %arg4[%c0_3, %c0_4] : memref<1x384xf32, #tpu.memory_space<vmem>>, vector<1x384xf32>
    %5 = vector.broadcast %4 : vector<1x384xf32> to vector<8x384xf32>
    %6 = arith.addf %3, %5 : vector<8x384xf32>
    %cst_5 = arith.constant 0.000000e+00 : f32
    %7 = vector.broadcast %cst_5 : f32 to vector<8x384xf32>
    %8 = arith.cmpf ogt, %6, %7 : vector<8x384xf32>
    %cst_6 = arith.constant 2.000000e-01 : f32
    %9 = vector.broadcast %cst_6 : f32 to vector<8x384xf32>
    %10 = arith.mulf %9, %6 : vector<8x384xf32>
    %11 = arith.select %8, %6, %10 : vector<8x384xi1>, vector<8x384xf32>
    %12 = arith.truncf %11 : vector<8x384xf32> to vector<8x384xbf16>
    %c0_7 = arith.constant 0 : index
    %c0_8 = arith.constant 0 : index
    %13 = vector.load %arg5[%c0_7, %c0_8] : memref<384x256xbf16, #tpu.memory_space<vmem>>, vector<384x256xbf16>
    %cst_9 = arith.constant dense<0.000000e+00> : vector<8x256xf32>
    %14 = tpu.matmul %12, %13, %cst_9 {dimension_numbers = #tpu.dot_dimension_numbers<[1], [0], [0], [1], [0, 0, 1, 1], [], []>} : vector<8x384xbf16>, vector<384x256xbf16>, vector<8x256xf32> -> vector<8x256xf32>
    %c0_10 = arith.constant 0 : index
    %c0_11 = arith.constant 0 : index
    %15 = vector.load %arg6[%c0_10, %c0_11] : memref<1x256xf32, #tpu.memory_space<vmem>>, vector<1x256xf32>
    %16 = vector.broadcast %15 : vector<1x256xf32> to vector<8x256xf32>
    %17 = arith.addf %14, %16 : vector<8x256xf32>
    %18 = arith.truncf %17 : vector<8x256xf32> to vector<8x256xbf16>
    %c0_12 = arith.constant 0 : index
    %c0_13 = arith.constant 0 : index
    %19 = vector.load %arg7[%c0_12, %c0_13] : memref<256x512xbf16, #tpu.memory_space<vmem>>, vector<256x512xbf16>
    %cst_14 = arith.constant dense<0.000000e+00> : vector<8x512xf32>
    %20 = tpu.matmul %18, %19, %cst_14 {dimension_numbers = #tpu.dot_dimension_numbers<[1], [0], [0], [1], [0, 0, 1, 1], [], []>} : vector<8x256xbf16>, vector<256x512xbf16>, vector<8x512xf32> -> vector<8x512xf32>
    %c0_15 = arith.constant 0 : index
    %c0_16 = arith.constant 0 : index
    %21 = vector.load %arg8[%c0_15, %c0_16] : memref<1x512xf32, #tpu.memory_space<vmem>>, vector<1x512xf32>
    %22 = vector.broadcast %21 : vector<1x512xf32> to vector<8x512xf32>
    %23 = arith.addf %20, %22 : vector<8x512xf32>
    %24 = vector.extract_strided_slice %23 {offsets = [0, 0], sizes = [8, 256], strides = [1, 1]} : vector<8x512xf32> to vector<8x256xf32>
    %25 = vector.extract_strided_slice %23 {offsets = [0, 256], sizes = [8, 256], strides = [1, 1]} : vector<8x512xf32> to vector<8x256xf32>
    %c0_17 = arith.constant 0 : index
    %c0_18 = arith.constant 0 : index
    %26 = vector.load %arg2[%c0_17, %c0_18] : memref<8x256xf32, #tpu.memory_space<vmem>>, vector<8x256xf32>
    %cst_19 = arith.constant 5.000000e-01 : f32
    %27 = vector.broadcast %cst_19 : f32 to vector<8x256xf32>
    %28 = arith.mulf %27, %25 : vector<8x256xf32>
    %29 = math.exp %28 : vector<8x256xf32>
    %30 = arith.mulf %26, %29 : vector<8x256xf32>
    %31 = arith.addf %24, %30 : vector<8x256xf32>
    %32 = arith.truncf %31 : vector<8x256xf32> to vector<8x256xbf16>
    %c0_20 = arith.constant 0 : index
    %c0_21 = arith.constant 0 : index
    %33 = vector.load %arg9[%c0_20, %c0_21] : memref<256x768xbf16, #tpu.memory_space<vmem>>, vector<256x768xbf16>
    %cst_22 = arith.constant dense<0.000000e+00> : vector<8x768xf32>
    %34 = tpu.matmul %32, %33, %cst_22 {dimension_numbers = #tpu.dot_dimension_numbers<[1], [0], [0], [1], [0, 0, 1, 1], [], []>} : vector<8x256xbf16>, vector<256x768xbf16>, vector<8x768xf32> -> vector<8x768xf32>
    %c0_23 = arith.constant 0 : index
    %c0_24 = arith.constant 0 : index
    %35 = vector.load %arg10[%c0_23, %c0_24] : memref<1x768xf32, #tpu.memory_space<vmem>>, vector<1x768xf32>
    %36 = vector.broadcast %35 : vector<1x768xf32> to vector<8x768xf32>
    %37 = arith.addf %34, %36 : vector<8x768xf32>
    %38 = math.tanh %37 : vector<8x768xf32>
    %c0_25 = arith.constant 0 : index
    %c0_26 = arith.constant 0 : index
    %39 = vector.load %arg11[%c0_25, %c0_26] : memref<8x768xf32, #tpu.memory_space<vmem>>, vector<8x768xf32>
    tpu.vector_store %arg11[%c0_25, %c0_26], %38 {strides = array<i32>} : memref<8x768xf32, #tpu.memory_space<vmem>>, vector<8x768xf32>,
    %c0_27 = arith.constant 0 : index
    %c0_28 = arith.constant 0 : index
    %40 = vector.load %arg12[%c0_27, %c0_28] : memref<8x512xf32, #tpu.memory_space<vmem>>, vector<8x512xf32>
    tpu.vector_store %arg12[%c0_27, %c0_28], %23 {strides = array<i32>} : memref<8x512xf32, #tpu.memory_space<vmem>>, vector<8x512xf32>,
    return
  }
  func.func @transform_0(%arg0: i32) -> (i32, i32) {
    %c0_i32 = arith.constant 0 : i32
    %c0_i32_0 = arith.constant 0 : i32
    return %arg0, %c0_i32 : i32, i32
  }
  func.func @transform_1(%arg0: i32) -> (i32, i32) {
    %c0_i32 = arith.constant 0 : i32
    %c0_i32_0 = arith.constant 0 : i32
    return %arg0, %c0_i32 : i32, i32
  }
  func.func @transform_2(%arg0: i32) -> (i32, i32) {
    %c0_i32 = arith.constant 0 : i32
    %c0_i32_0 = arith.constant 0 : i32
    %c0_i32_1 = arith.constant 0 : i32
    return %c0_i32, %c0_i32_0 : i32, i32
  }
  func.func @transform_3(%arg0: i32) -> (i32, i32) {
    %c0_i32 = arith.constant 0 : i32
    %c0_i32_0 = arith.constant 0 : i32
    %c0_i32_1 = arith.constant 0 : i32
    return %c0_i32, %c0_i32_0 : i32, i32
  }
  func.func @transform_4(%arg0: i32) -> (i32, i32) {
    %c0_i32 = arith.constant 0 : i32
    %c0_i32_0 = arith.constant 0 : i32
    %c0_i32_1 = arith.constant 0 : i32
    return %c0_i32, %c0_i32_0 : i32, i32
  }
  func.func @transform_5(%arg0: i32) -> (i32, i32) {
    %c0_i32 = arith.constant 0 : i32
    %c0_i32_0 = arith.constant 0 : i32
    %c0_i32_1 = arith.constant 0 : i32
    return %c0_i32, %c0_i32_0 : i32, i32
  }
  func.func @transform_6(%arg0: i32) -> (i32, i32) {
    %c0_i32 = arith.constant 0 : i32
    %c0_i32_0 = arith.constant 0 : i32
    %c0_i32_1 = arith.constant 0 : i32
    return %c0_i32, %c0_i32_0 : i32, i32
  }
  func.func @transform_7(%arg0: i32) -> (i32, i32) {
    %c0_i32 = arith.constant 0 : i32
    %c0_i32_0 = arith.constant 0 : i32
    %c0_i32_1 = arith.constant 0 : i32
    return %c0_i32, %c0_i32_0 : i32, i32
  }
  func.func @transform_8(%arg0: i32) -> (i32, i32) {
    %c0_i32 = arith.constant 0 : i32
    %c0_i32_0 = arith.constant 0 : i32
    %c0_i32_1 = arith.constant 0 : i32
    return %c0_i32, %c0_i32_0 : i32, i32
  }
  func.func @transform_9(%arg0: i32) -> (i32, i32) {
    %c0_i32 = arith.constant 0 : i32
    %c0_i32_0 = arith.constant 0 : i32
    %c0_i32_1 = arith.constant 0 : i32
    return %c0_i32, %c0_i32_0 : i32, i32
  }
  func.func @transform_10(%arg0: i32) -> (i32, i32) {
    %c0_i32 = arith.constant 0 : i32
    %c0_i32_0 = arith.constant 0 : i32
    return %arg0, %c0_i32 : i32, i32
  }
  func.func @transform_11(%arg0: i32) -> (i32, i32) {
    %c0_i32 = arith.constant 0 : i32
    %c0_i32_0 = arith.constant 0 : i32
    return %arg0, %c0_i32 : i32, i32
  }
}

</mosaic_0001>

<llo_original>
// kernel: _forward_impl.1
$region0: #{_forward_impl.1}
  #allocation0 [shape = 'u32[]', space=smem, size = 0x4, offset = 0x4, fixed_abs, tag = 'smem constant byte address 0x4 - core index']
  #allocation1 [shape = 'u32[72,128]{1,0:T(1,128)}', space=vmem, size = 0x9000, scoped, tag = 'internal scratch']
  %s0 = inlined_call_operand.vmem [shape: f32[8,768], index: 0, kind: input, shape index: {}]
  %s1 = inlined_call_operand.vmem [shape: f32[8,256], index: 1, kind: input, shape index: {}]
  %s2 = inlined_call_operand.hbm [shape: bf16[768,384], index: 2, kind: input, shape index: {}]
  %s3 = inlined_call_operand.vmem [shape: f32[1,384], index: 3, kind: input, shape index: {}]
  %s4 = inlined_call_operand.hbm [shape: bf16[384,256], index: 4, kind: input, shape index: {}]
  %s5 = inlined_call_operand.vmem [shape: f32[1,256], index: 5, kind: input, shape index: {}]
  %s6 = inlined_call_operand.hbm [shape: bf16[256,512], index: 6, kind: input, shape index: {}]
  %s7 = inlined_call_operand.vmem [shape: f32[1,512], index: 7, kind: input, shape index: {}]
  %s8 = inlined_call_operand.hbm [shape: bf16[256,768], index: 8, kind: input, shape index: {}]
  %s9 = inlined_call_operand.vmem [shape: f32[1,768], index: 9, kind: input, shape index: {}]
  %s10 = inlined_call_operand.hbm [shape: f32[8,768], index: 10, kind: output, shape index: {0}]
  %s11 = inlined_call_operand.vmem [shape: f32[8,512], index: 11, kind: output, shape index: {1}]
  %12 = xla_tuple %s10, %s11
  %s13 = sld [smem:[#allocation0]]
  $region74: #{_forward_impl.1} parent=0
    _
  %s15 = ssub.s32 1, %s13
  %s16 = scalar_select 0, %s15, %s13
  $region1: #{_forward_impl.1} parent=0
    #allocation2 [shape = 'u8[589824]{0}', space=vmem, size = 0x90000, scoped, tag = 'input window, operand 2, single buffered']
    #allocation3 [shape = 's32[1]{0}', space=sflag, size = 0x4, scoped, tag = 'scoped memory for _forward_impl.1']
    #allocation4 [shape = 's32[1]{0}', space=sflag, size = 0x4, scoped, tag = 'scoped memory for _forward_impl.1']
    #allocation5 [shape = 'u8[196608]{0}', space=vmem, size = 0x30000, scoped, tag = 'input window, operand 4, single buffered']
    #allocation6 [shape = 's32[1]{0}', space=sflag, size = 0x4, scoped, tag = 'scoped memory for _forward_impl.1']
    #allocation7 [shape = 'u8[262144]{0}', space=vmem, size = 0x40000, scoped, tag = 'input window, operand 6, single buffered']
    #allocation8 [shape = 'u8[393216]{0}', space=vmem, size = 0x60000, scoped, tag = 'input window, operand 8, single buffered']
    #allocation9 [shape = 's32[1]{0}', space=sflag, size = 0x4, scoped, tag = 'scoped memory for _forward_impl.1']
    #allocation10 [shape = 'u8[24576]{0}', space=vmem, size = 0x6000, scoped, tag = 'output window, operand 0, single buffered']
    %17 = vsyncpa [#allocation3], 0
    %18 = vsyncpa [#allocation6], 0
    %19 = vsyncpa [#allocation9], 0
    %20 = vsyncpa [#allocation4], 0
    // Predicated region
    $region2: #{_forward_impl.1} parent=1 // pred_check
      _
    $region3: #{_forward_impl.1} parent=1 // pred_check_branch
      %22 = sbr.rel (0) target = $region5
    $region4: #{_forward_impl.1} parent=1 // pred_region
      _
    $region5: #{_forward_impl.1} parent=1 // pred_fallthru
      _
    // Predicated region
    $region6: #{_forward_impl.1} parent=1 // pred_check
      _
    $region7: #{_forward_impl.1} parent=1 // pred_check_branch
      %24 = sbr.rel (0) target = $region9
    $region8: #{_forward_impl.1} parent=1 // pred_region
      _
    $region9: #{_forward_impl.1} parent=1 // pred_fallthru
      _
    // Predicated region
    $region10: #{_forward_impl.1} parent=1 // pred_check
      _
    $region11: #{_forward_impl.1} parent=1 // pred_check_branch
      %26 = sbr.rel (0) target = $region13
    $region12: #{_forward_impl.1} parent=1 // pred_region
      %28 = vsyncadd [#allocation3], 0
      %s29 = sshll.u32 %s2, 4
      %s30 = int_to_ptr.hbm [resolvable:$true] %s29
      %s31 = sshll.u32 [#allocation2], 4
      %s32 = int_to_ptr.vmem [resolvable:$true] %s31
      %37 = dma.hbm_to_vmem [thread:$0]  %s30, 18432, %s32, [#allocation3], 192, 192, 12
    $region13: #{_forward_impl.1} parent=1 // pred_fallthru
      _
    // Predicated region
    $region14: #{_forward_impl.1} parent=1 // pred_check
      _
    $region15: #{_forward_impl.1} parent=1 // pred_check_branch
      %39 = sbr.rel (0) target = $region17
    $region16: #{_forward_impl.1} parent=1 // pred_region
      _
    $region17: #{_forward_impl.1} parent=1 // pred_fallthru
      _
    // Predicated region
    $region18: #{_forward_impl.1} parent=1 // pred_check
      _
    $region19: #{_forward_impl.1} parent=1 // pred_check_branch
      %41 = sbr.rel (0) target = $region21
    $region20: #{_forward_impl.1} parent=1 // pred_region
      %43 = vsyncadd [#allocation6], 0
      %s44 = sshll.u32 %s4, 4
      %s45 = int_to_ptr.hbm [resolvable:$true] %s44
      %s46 = sshll.u32 [#allocation5], 4
      %s47 = int_to_ptr.vmem [resolvable:$true] %s46
      %52 = dma.hbm_to_vmem [thread:$0]  %s45, 6144, %s47, [#allocation6], 128, 128, 8
    $region21: #{_forward_impl.1} parent=1 // pred_fallthru
      _
    // Predicated region
    $region22: #{_forward_impl.1} parent=1 // pred_check
      _
    $region23: #{_forward_impl.1} parent=1 // pred_check_branch
      %54 = sbr.rel (0) target = $region25
    $region24: #{_forward_impl.1} parent=1 // pred_region
      _
    $region25: #{_forward_impl.1} parent=1 // pred_fallthru
      _
    // Predicated region
    $region26: #{_forward_impl.1} parent=1 // pred_check
      _
    $region27: #{_forward_impl.1} parent=1 // pred_check_branch
      %56 = sbr.rel (0) target = $region29
    $region28: #{_forward_impl.1} parent=1 // pred_region
      %58 = vsyncadd [#allocation6], 0
      %s59 = sshll.u32 %s6, 4
      %s60 = int_to_ptr.hbm [resolvable:$true] %s59
      %s61 = sshll.u32 [#allocation7], 4
      %s62 = int_to_ptr.vmem [resolvable:$true] %s61
      %67 = dma.hbm_to_vmem [thread:$0]  %s60, 8192, %s62, [#allocation6], 256, 256, 16
    $region29: #{_forward_impl.1} parent=1 // pred_fallthru
      _
    // Predicated region
    $region30: #{_forward_impl.1} parent=1 // pred_check
      _
    $region31: #{_forward_impl.1} parent=1 // pred_check_branch
      %69 = sbr.rel (0) target = $region33
    $region32: #{_forward_impl.1} parent=1 // pred_region
      _
    $region33: #{_forward_impl.1} parent=1 // pred_fallthru
      _
    // Predicated region
    $region34: #{_forward_impl.1} parent=1 // pred_check
      _
    $region35: #{_forward_impl.1} parent=1 // pred_check_branch
      %71 = sbr.rel (0) target = $region37
    $region36: #{_forward_impl.1} parent=1 // pred_region
      %73 = vsyncadd [#allocation9], 0
      %s74 = sshll.u32 %s8, 4
      %s75 = int_to_ptr.hbm [resolvable:$true] %s74
      %s76 = sshll.u32 [#allocation8], 4
      %s77 = int_to_ptr.vmem [resolvable:$true] %s76
      %82 = dma.hbm_to_vmem [thread:$0]  %s75, 12288, %s77, [#allocation9], 384, 384, 24
    $region37: #{_forward_impl.1} parent=1 // pred_fallthru
      _
    // Predicated region
    $region38: #{_forward_impl.1} parent=1 // pred_check
      _
    $region39: #{_forward_impl.1} parent=1 // pred_check_branch
      %84 = sbr.rel (0) target = $region41
    $region40: #{_forward_impl.1} parent=1 // pred_region
      _
    $region41: #{_forward_impl.1} parent=1 // pred_fallthru
      _
    // Predicated region
    $region42: #{_forward_impl.1} parent=1 // pred_check
      _
    $region43: #{_forward_impl.1} parent=1 // pred_check_branch
      %86 = sbr.rel (0) target = $region45
    $region44: #{_forward_impl.1} parent=1 // pred_region
      %88 = dma.done [#allocation3], 18432
    $region45: #{_forward_impl.1} parent=1 // pred_fallthru
      _
    // Predicated region
    $region46: #{_forward_impl.1} parent=1 // pred_check
      _
    $region47: #{_forward_impl.1} parent=1 // pred_check_branch
      %90 = sbr.rel (0) target = $region49
    $region48: #{_forward_impl.1} parent=1 // pred_region
      %92 = dma.done [#allocation6], 6144
    $region49: #{_forward_impl.1} parent=1 // pred_fallthru
      _
    // Predicated region
    $region50: #{_forward_impl.1} parent=1 // pred_check
      _
    $region51: #{_forward_impl.1} parent=1 // pred_check_branch
      %94 = sbr.rel (0) target = $region53
    $region52: #{_forward_impl.1} parent=1 // pred_region
      %96 = dma.done [#allocation6], 8192
    $region53: #{_forward_impl.1} parent=1 // pred_fallthru
      _
    // Predicated region
    $region54: #{_forward_impl.1} parent=1 // pred_check
      _
    $region55: #{_forward_impl.1} parent=1 // pred_check_branch
      %98 = sbr.rel (0) target = $region57
    $region56: #{_forward_impl.1} parent=1 // pred_region
      %100 = dma.done [#allocation9], 12288
    $region57: #{_forward_impl.1} parent=1 // pred_fallthru
      _
    %v101 = vld [vmem:[%s0] sm:$0xff]
    %v102 = vld [vmem:[%s0 + $0x8] sm:$0xff]
    %v103 = vld [vmem:[%s0 + $0x10] sm:$0xff]
    %v104 = vld [vmem:[%s0 + $0x18] sm:$0xff]
    %v105 = vld [vmem:[%s0 + $0x20] sm:$0xff]
    %v106 = vld [vmem:[%s0 + $0x28] sm:$0xff]
    %v107 = vpack.c.bf16 %v101, %v101
    %v108 = vpack.c.bf16 %v102, %v102
    %v109 = vpack.c.bf16 %v103, %v103
    %v110 = vpack.c.bf16 %v104, %v104
    %v111 = vpack.c.bf16 %v105, %v105
    %v112 = vpack.c.bf16 %v106, %v106
    %v113 = vld [vmem:[#allocation2] sm:$0xff]
    %v114 = vld [vmem:[#allocation2 + $0x8] sm:$0xf]
    %v115 = vld [vmem:[#allocation2 + $0xc] sm:$0xff]
    %v116 = vld [vmem:[#allocation2 + $0x14] sm:$0xf]
    %v117 = vld [vmem:[#allocation2 + $0x18] sm:$0xff]
    %v118 = vld [vmem:[#allocation2 + $0x20] sm:$0xf]
    %v119 = vld [vmem:[#allocation2 + $0x24] sm:$0xff]
    %v120 = vld [vmem:[#allocation2 + $0x2c] sm:$0xf]
    %v121 = vld [vmem:[#allocation2 + $0x30] sm:$0xff]
    %v122 = vld [vmem:[#allocation2 + $0x38] sm:$0xf]
    %v123 = vld [vmem:[#allocation2 + $0x3c] sm:$0xff]
    %v124 = vld [vmem:[#allocation2 + $0x44] sm:$0xf]
    %v125 = vld [vmem:[#allocation2 + $0x48] sm:$0xff]
    %v126 = vld [vmem:[#allocation2 + $0x50] sm:$0xf]
    %v127 = vld [vmem:[#allocation2 + $0x54] sm:$0xff]
    %v128 = vld [vmem:[#allocation2 + $0x5c] sm:$0xf]
    %v129 = vld [vmem:[#allocation2 + $0x60] sm:$0xff]
    %v130 = vld [vmem:[#allocation2 + $0x68] sm:$0xf]
    %v131 = vld [vmem:[#allocation2 + $0x6c] sm:$0xff]
    %v132 = vld [vmem:[#allocation2 + $0x74] sm:$0xf]
    %v133 = vld [vmem:[#allocation2 + $0x78] sm:$0xff]
    %v134 = vld [vmem:[#allocation2 + $0x80] sm:$0xf]
    %v135 = vld [vmem:[#allocation2 + $0x84] sm:$0xff]
    %v136 = vld [vmem:[#allocation2 + $0x8c] sm:$0xf]
    %v137 = vld [vmem:[#allocation2 + $0x90] sm:$0xff]
    %v138 = vld [vmem:[#allocation2 + $0x98] sm:$0xf]
    %v139 = vld [vmem:[#allocation2 + $0x9c] sm:$0xff]
    %v140 = vld [vmem:[#allocation2 + $0xa4] sm:$0xf]
    %v141 = vld [vmem:[#allocation2 + $0xa8] sm:$0xff]
    %v142 = vld [vmem:[#allocation2 + $0xb0] sm:$0xf]
    %v143 = vld [vmem:[#allocation2 + $0xb4] sm:$0xff]
    %v144 = vld [vmem:[#allocation2 + $0xbc] sm:$0xf]
    %v145 = vld [vmem:[#allocation2 + $0xc0] sm:$0xff]
    %v146 = vld [vmem:[#allocation2 + $0xc8] sm:$0xf]
    %v147 = vld [vmem:[#allocation2 + $0xcc] sm:$0xff]
    %v148 = vld [vmem:[#allocation2 + $0xd4] sm:$0xf]
    %v149 = vld [vmem:[#allocation2 + $0xd8] sm:$0xff]
    %v150 = vld [vmem:[#allocation2 + $0xe0] sm:$0xf]
    %v151 = vld [vmem:[#allocation2 + $0xe4] sm:$0xff]
    %v152 = vld [vmem:[#allocation2 + $0xec] sm:$0xf]
    %v153 = vld [vmem:[#allocation2 + $0xf0] sm:$0xff]
    %v154 = vld [vmem:[#allocation2 + $0xf8] sm:$0xf]
    %v155 = vld [vmem:[#allocation2 + $0xfc] sm:$0xff]
    %v156 = vld [vmem:[#allocation2 + $0x104] sm:$0xf]
    %v157 = vld [vmem:[#allocation2 + $0x108] sm:$0xff]
    %v158 = vld [vmem:[#allocation2 + $0x110] sm:$0xf]
    %v159 = vld [vmem:[#allocation2 + $0x114] sm:$0xff]
    %v160 = vld [vmem:[#allocation2 + $0x11c] sm:$0xf]
    %v161 = vld [vmem:[#allocation2 + $0x120] sm:$0xff]
    %v162 = vld [vmem:[#allocation2 + $0x128] sm:$0xf]
    %v163 = vld [vmem:[#allocation2 + $0x12c] sm:$0xff]
    %v164 = vld [vmem:[#allocation2 + $0x134] sm:$0xf]
    %v165 = vld [vmem:[#allocation2 + $0x138] sm:$0xff]
    %v166 = vld [vmem:[#allocation2 + $0x140] sm:$0xf]
    %v167 = vld [vmem:[#allocation2 + $0x144] sm:$0xff]
    %v168 = vld [vmem:[#allocation2 + $0x14c] sm:$0xf]
    %v169 = vld [vmem:[#allocation2 + $0x150] sm:$0xff]
    %v170 = vld [vmem:[#allocation2 + $0x158] sm:$0xf]
    %v171 = vld [vmem:[#allocation2 + $0x15c] sm:$0xff]
    %v172 = vld [vmem:[#allocation2 + $0x164] sm:$0xf]
    %v173 = vld [vmem:[#allocation2 + $0x168] sm:$0xff]
    %v174 = vld [vmem:[#allocation2 + $0x170] sm:$0xf]
    %v175 = vld [vmem:[#allocation2 + $0x174] sm:$0xff]
    %v176 = vld [vmem:[#allocation2 + $0x17c] sm:$0xf]
    %v177 = vld [vmem:[#allocation2 + $0x180] sm:$0xff]
    %v178 = vld [vmem:[#allocation2 + $0x188] sm:$0xf]
    %v179 = vld [vmem:[#allocation2 + $0x18c] sm:$0xff]
    %v180 = vld [vmem:[#allocation2 + $0x194] sm:$0xf]
    %v181 = vld [vmem:[#allocation2 + $0x198] sm:$0xff]
    %v182 = vld [vmem:[#allocation2 + $0x1a0] sm:$0xf]
    %v183 = vld [vmem:[#allocation2 + $0x1a4] sm:$0xff]
    %v184 = vld [vmem:[#allocation2 + $0x1ac] sm:$0xf]
    %v185 = vld [vmem:[#allocation2 + $0x1b0] sm:$0xff]
    %v186 = vld [vmem:[#allocation2 + $0x1b8] sm:$0xf]
    %v187 = vld [vmem:[#allocation2 + $0x1bc] sm:$0xff]
    %v188 = vld [vmem:[#allocation2 + $0x1c4] sm:$0xf]
    %v189 = vld [vmem:[#allocation2 + $0x1c8] sm:$0xff]
    %v190 = vld [vmem:[#allocation2 + $0x1d0] sm:$0xf]
    %v191 = vld [vmem:[#allocation2 + $0x1d4] sm:$0xff]
    %v192 = vld [vmem:[#allocation2 + $0x1dc] sm:$0xf]
    %v193 = vld [vmem:[#allocation2 + $0x1e0] sm:$0xff]
    %v194 = vld [vmem:[#allocation2 + $0x1e8] sm:$0xf]
    %v195 = vld [vmem:[#allocation2 + $0x1ec] sm:$0xff]
    %v196 = vld [vmem:[#allocation2 + $0x1f4] sm:$0xf]
    %v197 = vld [vmem:[#allocation2 + $0x1f8] sm:$0xff]
    %v198 = vld [vmem:[#allocation2 + $0x200] sm:$0xf]
    %v199 = vld [vmem:[#allocation2 + $0x204] sm:$0xff]
    %v200 = vld [vmem:[#allocation2 + $0x20c] sm:$0xf]
    %v201 = vld [vmem:[#allocation2 + $0x210] sm:$0xff]
    %v202 = vld [vmem:[#allocation2 + $0x218] sm:$0xf]
    %v203 = vld [vmem:[#allocation2 + $0x21c] sm:$0xff]
    %v204 = vld [vmem:[#allocation2 + $0x224] sm:$0xf]
    %v205 = vld [vmem:[#allocation2 + $0x228] sm:$0xff]
    %v206 = vld [vmem:[#allocation2 + $0x230] sm:$0xf]
    %v207 = vld [vmem:[#allocation2 + $0x234] sm:$0xff]
    %v208 = vld [vmem:[#allocation2 + $0x23c] sm:$0xf]
    %v209 = vld [vmem:[#allocation2 + $0x240] sm:$0xff]
    %v210 = vld [vmem:[#allocation2 + $0x248] sm:$0xf]
    %v211 = vld [vmem:[#allocation2 + $0x24c] sm:$0xff]
    %v212 = vld [vmem:[#allocation2 + $0x254] sm:$0xf]
    %v213 = vld [vmem:[#allocation2 + $0x258] sm:$0xff]
    %v214 = vld [vmem:[#allocation2 + $0x260] sm:$0xf]
    %v215 = vld [vmem:[#allocation2 + $0x264] sm:$0xff]
    %v216 = vld [vmem:[#allocation2 + $0x26c] sm:$0xf]
    %v217 = vld [vmem:[#allocation2 + $0x270] sm:$0xff]
    %v218 = vld [vmem:[#allocation2 + $0x278] sm:$0xf]
    %v219 = vld [vmem:[#allocation2 + $0x27c] sm:$0xff]
    %v220 = vld [vmem:[#allocation2 + $0x284] sm:$0xf]
    %v221 = vld [vmem:[#allocation2 + $0x288] sm:$0xff]
    %v222 = vld [vmem:[#allocation2 + $0x290] sm:$0xf]
    %v223 = vld [vmem:[#allocation2 + $0x294] sm:$0xff]
    %v224 = vld [vmem:[#allocation2 + $0x29c] sm:$0xf]
    %v225 = vld [vmem:[#allocation2 + $0x2a0] sm:$0xff]
    %v226 = vld [vmem:[#allocation2 + $0x2a8] sm:$0xf]
    %v227 = vld [vmem:[#allocation2 + $0x2ac] sm:$0xff]
    %v228 = vld [vmem:[#allocation2 + $0x2b4] sm:$0xf]
    %v229 = vld [vmem:[#allocation2 + $0x2b8] sm:$0xff]
    %v230 = vld [vmem:[#allocation2 + $0x2c0] sm:$0xf]
    %v231 = vld [vmem:[#allocation2 + $0x2c4] sm:$0xff]
    %v232 = vld [vmem:[#allocation2 + $0x2cc] sm:$0xf]
    %v233 = vld [vmem:[#allocation2 + $0x2d0] sm:$0xff]
    %v234 = vld [vmem:[#allocation2 + $0x2d8] sm:$0xf]
    %v235 = vld [vmem:[#allocation2 + $0x2dc] sm:$0xff]
    %v236 = vld [vmem:[#allocation2 + $0x2e4] sm:$0xf]
    %v237 = vld [vmem:[#allocation2 + $0x2e8] sm:$0xff]
    %v238 = vld [vmem:[#allocation2 + $0x2f0] sm:$0xf]
    %v239 = vld [vmem:[#allocation2 + $0x2f4] sm:$0xff]
    %v240 = vld [vmem:[#allocation2 + $0x2fc] sm:$0xf]
    %v241 = vld [vmem:[#allocation2 + $0x300] sm:$0xff]
    %v242 = vld [vmem:[#allocation2 + $0x308] sm:$0xf]
    %v243 = vld [vmem:[#allocation2 + $0x30c] sm:$0xff]
    %v244 = vld [vmem:[#allocation2 + $0x314] sm:$0xf]
    %v245 = vld [vmem:[#allocation2 + $0x318] sm:$0xff]
    %v246 = vld [vmem:[#allocation2 + $0x320] sm:$0xf]
    %v247 = vld [vmem:[#allocation2 + $0x324] sm:$0xff]
    %v248 = vld [vmem:[#allocation2 + $0x32c] sm:$0xf]
    %v249 = vld [vmem:[#allocation2 + $0x330] sm:$0xff]
    %v250 = vld [vmem:[#allocation2 + $0x338] sm:$0xf]
    %v251 = vld [vmem:[#allocation2 + $0x33c] sm:$0xff]
    %v252 = vld [vmem:[#allocation2 + $0x344] sm:$0xf]
    %v253 = vld [vmem:[#allocation2 + $0x348] sm:$0xff]
    %v254 = vld [vmem:[#allocation2 + $0x350] sm:$0xf]
    %v255 = vld [vmem:[#allocation2 + $0x354] sm:$0xff]
    %v256 = vld [vmem:[#allocation2 + $0x35c] sm:$0xf]
    %v257 = vld [vmem:[#allocation2 + $0x360] sm:$0xff]
    %v258 = vld [vmem:[#allocation2 + $0x368] sm:$0xf]
    %v259 = vld [vmem:[#allocation2 + $0x36c] sm:$0xff]
    %v260 = vld [vmem:[#allocation2 + $0x374] sm:$0xf]
    %v261 = vld [vmem:[#allocation2 + $0x378] sm:$0xff]
    %v262 = vld [vmem:[#allocation2 + $0x380] sm:$0xf]
    %v263 = vld [vmem:[#allocation2 + $0x384] sm:$0xff]
    %v264 = vld [vmem:[#allocation2 + $0x38c] sm:$0xf]
    %v265 = vld [vmem:[#allocation2 + $0x390] sm:$0xff]
    %v266 = vld [vmem:[#allocation2 + $0x398] sm:$0xf]
    %v267 = vld [vmem:[#allocation2 + $0x39c] sm:$0xff]
    %v268 = vld [vmem:[#allocation2 + $0x3a4] sm:$0xf]
    %v269 = vld [vmem:[#allocation2 + $0x3a8] sm:$0xff]
    %v270 = vld [vmem:[#allocation2 + $0x3b0] sm:$0xf]
    %v271 = vld [vmem:[#allocation2 + $0x3b4] sm:$0xff]
    %v272 = vld [vmem:[#allocation2 + $0x3bc] sm:$0xf]
    %v273 = vld [vmem:[#allocation2 + $0x3c0] sm:$0xff]
    %v274 = vld [vmem:[#allocation2 + $0x3c8] sm:$0xf]
    %v275 = vld [vmem:[#allocation2 + $0x3cc] sm:$0xff]
    %v276 = vld [vmem:[#allocation2 + $0x3d4] sm:$0xf]
    %v277 = vld [vmem:[#allocation2 + $0x3d8] sm:$0xff]
    %v278 = vld [vmem:[#allocation2 + $0x3e0] sm:$0xf]
    %v279 = vld [vmem:[#allocation2 + $0x3e4] sm:$0xff]
    %v280 = vld [vmem:[#allocation2 + $0x3ec] sm:$0xf]
    %v281 = vld [vmem:[#allocation2 + $0x3f0] sm:$0xff]
    %v282 = vld [vmem:[#allocation2 + $0x3f8] sm:$0xf]
    %v283 = vld [vmem:[#allocation2 + $0x3fc] sm:$0xff]
    %v284 = vld [vmem:[#allocation2 + $0x404] sm:$0xf]
    %v285 = vld [vmem:[#allocation2 + $0x408] sm:$0xff]
    %v286 = vld [vmem:[#allocation2 + $0x410] sm:$0xf]
    %v287 = vld [vmem:[#allocation2 + $0x414] sm:$0xff]
    %v288 = vld [vmem:[#allocation2 + $0x41c] sm:$0xf]
    %v289 = vld [vmem:[#allocation2 + $0x420] sm:$0xff]
    %v290 = vld [vmem:[#allocation2 + $0x428] sm:$0xf]
    %v291 = vld [vmem:[#allocation2 + $0x42c] sm:$0xff]
    %v292 = vld [vmem:[#allocation2 + $0x434] sm:$0xf]
    %v293 = vld [vmem:[#allocation2 + $0x438] sm:$0xff]
    %v294 = vld [vmem:[#allocation2 + $0x440] sm:$0xf]
    %v295 = vld [vmem:[#allocation2 + $0x444] sm:$0xff]
    %v296 = vld [vmem:[#allocation2 + $0x44c] sm:$0xf]
    %v297 = vld [vmem:[#allocation2 + $0x450] sm:$0xff]
    %v298 = vld [vmem:[#allocation2 + $0x458] sm:$0xf]
    %v299 = vld [vmem:[#allocation2 + $0x45c] sm:$0xff]
    %v300 = vld [vmem:[#allocation2 + $0x464] sm:$0xf]
    %v301 = vld [vmem:[#allocation2 + $0x468] sm:$0xff]
    %v302 = vld [vmem:[#allocation2 + $0x470] sm:$0xf]
    %v303 = vld [vmem:[#allocation2 + $0x474] sm:$0xff]
    %v304 = vld [vmem:[#allocation2 + $0x47c] sm:$0xf]
    %v305 = vld [vmem:[%s3] sm:$0x7]
    %v307 = vperm.slane %v305, 0
    %v308 = vperm.slane %v305, 1
    %v309 = vperm.slane %v305, 2
    %v505 = vunpack.c.l.b16 %v113
    %v506 = vunpack.c.h.b16 %v113
    %v507 = vunpack.c.l.b16 %v114
    %v508 = vunpack.c.l.b16 %v115
    %v509 = vunpack.c.h.b16 %v115
    %v510 = vunpack.c.l.b16 %v116
    %v511 = vunpack.c.l.b16 %v117
    %v512 = vunpack.c.h.b16 %v117
    %v513 = vunpack.c.l.b16 %v118
    %v514 = vunpack.c.l.b16 %v119
    %v515 = vunpack.c.h.b16 %v119
    %v516 = vunpack.c.l.b16 %v120
    %v517 = vunpack.c.l.b16 %v121
    %v518 = vunpack.c.h.b16 %v121
    %v519 = vunpack.c.l.b16 %v122
    %v520 = vunpack.c.l.b16 %v123
    %v521 = vunpack.c.h.b16 %v123
    %v522 = vunpack.c.l.b16 %v124
    %v523 = vunpack.c.l.b16 %v125
    %v524 = vunpack.c.h.b16 %v125
    %v525 = vunpack.c.l.b16 %v126
    %v526 = vunpack.c.l.b16 %v127
    %v527 = vunpack.c.h.b16 %v127
    %v528 = vunpack.c.l.b16 %v128
    %v529 = vunpack.c.l.b16 %v129
    %v530 = vunpack.c.h.b16 %v129
    %v531 = vunpack.c.l.b16 %v130
    %v532 = vunpack.c.l.b16 %v131
    %v533 = vunpack.c.h.b16 %v131
    %v534 = vunpack.c.l.b16 %v132
    %v535 = vunpack.c.l.b16 %v133
    %v536 = vunpack.c.h.b16 %v133
    %v537 = vunpack.c.l.b16 %v134
    %v538 = vunpack.c.l.b16 %v135
    %v539 = vunpack.c.h.b16 %v135
    %v540 = vunpack.c.l.b16 %v136
    %v541 = vunpack.c.l.b16 %v137
    %v542 = vunpack.c.h.b16 %v137
    %v543 = vunpack.c.l.b16 %v138
    %v544 = vunpack.c.l.b16 %v139
    %v545 = vunpack.c.h.b16 %v139
    %v546 = vunpack.c.l.b16 %v140
    %v547 = vunpack.c.l.b16 %v141
    %v548 = vunpack.c.h.b16 %v141
    %v549 = vunpack.c.l.b16 %v142
    %v550 = vunpack.c.l.b16 %v143
    %v551 = vunpack.c.h.b16 %v143
    %v552 = vunpack.c.l.b16 %v144
    %v553 = vunpack.c.l.b16 %v145
    %v554 = vunpack.c.h.b16 %v145
    %v555 = vunpack.c.l.b16 %v146
    %v556 = vunpack.c.l.b16 %v147
    %v557 = vunpack.c.h.b16 %v147
    %v558 = vunpack.c.l.b16 %v148
    %v559 = vunpack.c.l.b16 %v149
    %v560 = vunpack.c.h.b16 %v149
    %v561 = vunpack.c.l.b16 %v150
    %v562 = vunpack.c.l.b16 %v151
    %v563 = vunpack.c.h.b16 %v151
    %v564 = vunpack.c.l.b16 %v152
    %v565 = vunpack.c.l.b16 %v153
    %v566 = vunpack.c.h.b16 %v153
    %v567 = vunpack.c.l.b16 %v154
    %v568 = vunpack.c.l.b16 %v155
    %v569 = vunpack.c.h.b16 %v155
    %v570 = vunpack.c.l.b16 %v156
    %v571 = vunpack.c.l.b16 %v157
    %v572 = vunpack.c.h.b16 %v157
    %v573 = vunpack.c.l.b16 %v158
    %v574 = vunpack.c.l.b16 %v159
    %v575 = vunpack.c.h.b16 %v159
    %v576 = vunpack.c.l.b16 %v160
    %v577 = vunpack.c.l.b16 %v161
    %v578 = vunpack.c.h.b16 %v161
    %v579 = vunpack.c.l.b16 %v162
    %v580 = vunpack.c.l.b16 %v163
    %v581 = vunpack.c.h.b16 %v163
    %v582 = vunpack.c.l.b16 %v164
    %v583 = vunpack.c.l.b16 %v165
    %v584 = vunpack.c.h.b16 %v165
    %v585 = vunpack.c.l.b16 %v166
    %v586 = vunpack.c.l.b16 %v167
    %v587 = vunpack.c.h.b16 %v167
    %v588 = vunpack.c.l.b16 %v168
    %v589 = vunpack.c.l.b16 %v169
    %v590 = vunpack.c.h.b16 %v169
    %v591 = vunpack.c.l.b16 %v170
    %v592 = vunpack.c.l.b16 %v171
    %v593 = vunpack.c.h.b16 %v171
    %v594 = vunpack.c.l.b16 %v172
    %v595 = vunpack.c.l.b16 %v173
    %v596 = vunpack.c.h.b16 %v173
    %v597 = vunpack.c.l.b16 %v174
    %v598 = vunpack.c.l.b16 %v175
    %v599 = vunpack.c.h.b16 %v175
    %v600 = vunpack.c.l.b16 %v176
    %v601 = vunpack.c.l.b16 %v177
    %v602 = vunpack.c.h.b16 %v177
    %v603 = vunpack.c.l.b16 %v178
    %v604 = vunpack.c.l.b16 %v179
    %v605 = vunpack.c.h.b16 %v179
    %v606 = vunpack.c.l.b16 %v180
    %v607 = vunpack.c.l.b16 %v181
    %v608 = vunpack.c.h.b16 %v181
    %v609 = vunpack.c.l.b16 %v182
    %v610 = vunpack.c.l.b16 %v183
    %v611 = vunpack.c.h.b16 %v183
    %v612 = vunpack.c.l.b16 %v184
    %v613 = vunpack.c.l.b16 %v185
    %v614 = vunpack.c.h.b16 %v185
    %v615 = vunpack.c.l.b16 %v186
    %v616 = vunpack.c.l.b16 %v187
    %v617 = vunpack.c.h.b16 %v187
    %v618 = vunpack.c.l.b16 %v188
    %v619 = vunpack.c.l.b16 %v189
    %v620 = vunpack.c.h.b16 %v189
    %v621 = vunpack.c.l.b16 %v190
    %v622 = vunpack.c.l.b16 %v191
    %v623 = vunpack.c.h.b16 %v191
    %v624 = vunpack.c.l.b16 %v192
    %v625 = vunpack.c.l.b16 %v193
    %v626 = vunpack.c.h.b16 %v193
    %v627 = vunpack.c.l.b16 %v194
    %v628 = vunpack.c.l.b16 %v195
    %v629 = vunpack.c.h.b16 %v195
    %v630 = vunpack.c.l.b16 %v196
    %v631 = vunpack.c.l.b16 %v197
    %v632 = vunpack.c.h.b16 %v197
    %v633 = vunpack.c.l.b16 %v198
    %v634 = vunpack.c.l.b16 %v199
    %v635 = vunpack.c.h.b16 %v199
    %v636 = vunpack.c.l.b16 %v200
    %v637 = vunpack.c.l.b16 %v201
    %v638 = vunpack.c.h.b16 %v201
    %v639 = vunpack.c.l.b16 %v202
    %v640 = vunpack.c.l.b16 %v203
    %v641 = vunpack.c.h.b16 %v203
    %v642 = vunpack.c.l.b16 %v204
    %v643 = vunpack.c.l.b16 %v205
    %v644 = vunpack.c.h.b16 %v205
    %v645 = vunpack.c.l.b16 %v206
    %v646 = vunpack.c.l.b16 %v207
    %v647 = vunpack.c.h.b16 %v207
    %v648 = vunpack.c.l.b16 %v208
    %v649 = vunpack.c.l.b16 %v209
    %v650 = vunpack.c.h.b16 %v209
    %v651 = vunpack.c.l.b16 %v210
    %v652 = vunpack.c.l.b16 %v211
    %v653 = vunpack.c.h.b16 %v211
    %v654 = vunpack.c.l.b16 %v212
    %v655 = vunpack.c.l.b16 %v213
    %v656 = vunpack.c.h.b16 %v213
    %v657 = vunpack.c.l.b16 %v214
    %v658 = vunpack.c.l.b16 %v215
    %v659 = vunpack.c.h.b16 %v215
    %v660 = vunpack.c.l.b16 %v216
    %v661 = vunpack.c.l.b16 %v217
    %v662 = vunpack.c.h.b16 %v217
    %v663 = vunpack.c.l.b16 %v218
    %v664 = vunpack.c.l.b16 %v219
    %v665 = vunpack.c.h.b16 %v219
    %v666 = vunpack.c.l.b16 %v220
    %v667 = vunpack.c.l.b16 %v221
    %v668 = vunpack.c.h.b16 %v221
    %v669 = vunpack.c.l.b16 %v222
    %v670 = vunpack.c.l.b16 %v223
    %v671 = vunpack.c.h.b16 %v223
    %v672 = vunpack.c.l.b16 %v224
    %v673 = vunpack.c.l.b16 %v225
    %v674 = vunpack.c.h.b16 %v225
    %v675 = vunpack.c.l.b16 %v226
    %v676 = vunpack.c.l.b16 %v227
    %v677 = vunpack.c.h.b16 %v227
    %v678 = vunpack.c.l.b16 %v228
    %v679 = vunpack.c.l.b16 %v229
    %v680 = vunpack.c.h.b16 %v229
    %v681 = vunpack.c.l.b16 %v230
    %v682 = vunpack.c.l.b16 %v231
    %v683 = vunpack.c.h.b16 %v231
    %v684 = vunpack.c.l.b16 %v232
    %v685 = vunpack.c.l.b16 %v233
    %v686 = vunpack.c.h.b16 %v233
    %v687 = vunpack.c.l.b16 %v234
    %v688 = vunpack.c.l.b16 %v235
    %v689 = vunpack.c.h.b16 %v235
    %v690 = vunpack.c.l.b16 %v236
    %v691 = vunpack.c.l.b16 %v237
    %v692 = vunpack.c.h.b16 %v237
    %v693 = vunpack.c.l.b16 %v238
    %v694 = vunpack.c.l.b16 %v239
    %v695 = vunpack.c.h.b16 %v239
    %v696 = vunpack.c.l.b16 %v240
    %v697 = vunpack.c.l.b16 %v241
    %v698 = vunpack.c.h.b16 %v241
    %v699 = vunpack.c.l.b16 %v242
    %v700 = vunpack.c.l.b16 %v243
    %v701 = vunpack.c.h.b16 %v243
    %v702 = vunpack.c.l.b16 %v244
    %v703 = vunpack.c.l.b16 %v245
    %v704 = vunpack.c.h.b16 %v245
    %v705 = vunpack.c.l.b16 %v246
    %v706 = vunpack.c.l.b16 %v247
    %v707 = vunpack.c.h.b16 %v247
    %v708 = vunpack.c.l.b16 %v248
    %v709 = vunpack.c.l.b16 %v249
    %v710 = vunpack.c.h.b16 %v249
    %v711 = vunpack.c.l.b16 %v250
    %v712 = vunpack.c.l.b16 %v251
    %v713 = vunpack.c.h.b16 %v251
    %v714 = vunpack.c.l.b16 %v252
    %v715 = vunpack.c.l.b16 %v253
    %v716 = vunpack.c.h.b16 %v253
    %v717 = vunpack.c.l.b16 %v254
    %v718 = vunpack.c.l.b16 %v255
    %v719 = vunpack.c.h.b16 %v255
    %v720 = vunpack.c.l.b16 %v256
    %v721 = vunpack.c.l.b16 %v257
    %v722 = vunpack.c.h.b16 %v257
    %v723 = vunpack.c.l.b16 %v258
    %v724 = vunpack.c.l.b16 %v259
    %v725 = vunpack.c.h.b16 %v259
    %v726 = vunpack.c.l.b16 %v260
    %v727 = vunpack.c.l.b16 %v261
    %v728 = vunpack.c.h.b16 %v261
    %v729 = vunpack.c.l.b16 %v262
    %v730 = vunpack.c.l.b16 %v263
    %v731 = vunpack.c.h.b16 %v263
    %v732 = vunpack.c.l.b16 %v264
    %v733 = vunpack.c.l.b16 %v265
    %v734 = vunpack.c.h.b16 %v265
    %v735 = vunpack.c.l.b16 %v266
    %v736 = vunpack.c.l.b16 %v267
    %v737 = vunpack.c.h.b16 %v267
    %v738 = vunpack.c.l.b16 %v268
    %v739 = vunpack.c.l.b16 %v269
    %v740 = vunpack.c.h.b16 %v269
    %v741 = vunpack.c.l.b16 %v270
    %v742 = vunpack.c.l.b16 %v271
    %v743 = vunpack.c.h.b16 %v271
    %v744 = vunpack.c.l.b16 %v272
    %v745 = vunpack.c.l.b16 %v273
    %v746 = vunpack.c.h.b16 %v273
    %v747 = vunpack.c.l.b16 %v274
    %v748 = vunpack.c.l.b16 %v275
    %v749 = vunpack.c.h.b16 %v275
    %v750 = vunpack.c.l.b16 %v276
    %v751 = vunpack.c.l.b16 %v277
    %v752 = vunpack.c.h.b16 %v277
    %v753 = vunpack.c.l.b16 %v278
    %v754 = vunpack.c.l.b16 %v279
    %v755 = vunpack.c.h.b16 %v279
    %v756 = vunpack.c.l.b16 %v280
    %v757 = vunpack.c.l.b16 %v281
    %v758 = vunpack.c.h.b16 %v281
    %v759 = vunpack.c.l.b16 %v282
    %v760 = vunpack.c.l.b16 %v283
    %v761 = vunpack.c.h.b16 %v283
    %v762 = vunpack.c.l.b16 %v284
    %v763 = vunpack.c.l.b16 %v285
    %v764 = vunpack.c.h.b16 %v285
    %v765 = vunpack.c.l.b16 %v286
    %v766 = vunpack.c.l.b16 %v287
    %v767 = vunpack.c.h.b16 %v287
    %v768 = vunpack.c.l.b16 %v288
    %v769 = vunpack.c.l.b16 %v289
    %v770 = vunpack.c.h.b16 %v289
    %v771 = vunpack.c.l.b16 %v290
    %v772 = vunpack.c.l.b16 %v291
    %v773 = vunpack.c.h.b16 %v291
    %v774 = vunpack.c.l.b16 %v292
    %v775 = vunpack.c.l.b16 %v293
    %v776 = vunpack.c.h.b16 %v293
    %v777 = vunpack.c.l.b16 %v294
    %v778 = vunpack.c.l.b16 %v295
    %v779 = vunpack.c.h.b16 %v295
    %v780 = vunpack.c.l.b16 %v296
    %v781 = vunpack.c.l.b16 %v297
    %v782 = vunpack.c.h.b16 %v297
    %v783 = vunpack.c.l.b16 %v298
    %v784 = vunpack.c.l.b16 %v299
    %v785 = vunpack.c.h.b16 %v299
    %v786 = vunpack.c.l.b16 %v300
    %v787 = vunpack.c.l.b16 %v301
    %v788 = vunpack.c.h.b16 %v301
    %v789 = vunpack.c.l.b16 %v302
    %v790 = vunpack.c.l.b16 %v303
    %v791 = vunpack.c.h.b16 %v303
    %v792 = vunpack.c.l.b16 %v304
    %v793 = vpack.c.b16 %v508, %v505
    %v794 = vpack.c.b16 %v509, %v506
    %v795 = vpack.c.b16 %v510, %v507
    %v796 = vpack.c.b16 %v514, %v511
    %v797 = vpack.c.b16 %v515, %v512
    %v798 = vpack.c.b16 %v516, %v513
    %v799 = vpack.c.b16 %v520, %v517
    %v800 = vpack.c.b16 %v521, %v518
    %v801 = vpack.c.b16 %v522, %v519
    %v802 = vpack.c.b16 %v526, %v523
    %v803 = vpack.c.b16 %v527, %v524
    %v804 = vpack.c.b16 %v528, %v525
    %v805 = vpack.c.b16 %v532, %v529
    %v806 = vpack.c.b16 %v533, %v530
    %v807 = vpack.c.b16 %v534, %v531
    %v808 = vpack.c.b16 %v538, %v535
    %v809 = vpack.c.b16 %v539, %v536
    %v810 = vpack.c.b16 %v540, %v537
    %v811 = vpack.c.b16 %v544, %v541
    %v812 = vpack.c.b16 %v545, %v542
    %v813 = vpack.c.b16 %v546, %v543
    %v814 = vpack.c.b16 %v550, %v547
    %v815 = vpack.c.b16 %v551, %v548
    %v816 = vpack.c.b16 %v552, %v549
    %v817 = vpack.c.b16 %v556, %v553
    %v818 = vpack.c.b16 %v557, %v554
    %v819 = vpack.c.b16 %v558, %v555
    %v820 = vpack.c.b16 %v562, %v559
    %v821 = vpack.c.b16 %v563, %v560
    %v822 = vpack.c.b16 %v564, %v561
    %v823 = vpack.c.b16 %v568, %v565
    %v824 = vpack.c.b16 %v569, %v566
    %v825 = vpack.c.b16 %v570, %v567
    %v826 = vpack.c.b16 %v574, %v571
    %v827 = vpack.c.b16 %v575, %v572
    %v828 = vpack.c.b16 %v576, %v573
    %v829 = vpack.c.b16 %v580, %v577
    %v830 = vpack.c.b16 %v581, %v578
    %v831 = vpack.c.b16 %v582, %v579
    %v832 = vpack.c.b16 %v586, %v583
    %v833 = vpack.c.b16 %v587, %v584
    %v834 = vpack.c.b16 %v588, %v585
    %v835 = vpack.c.b16 %v592, %v589
    %v836 = vpack.c.b16 %v593, %v590
    %v837 = vpack.c.b16 %v594, %v591
    %v838 = vpack.c.b16 %v598, %v595
    %v839 = vpack.c.b16 %v599, %v596
    %v840 = vpack.c.b16 %v600, %v597
    %v841 = vpack.c.b16 %v604, %v601
    %v842 = vpack.c.b16 %v605, %v602
    %v843 = vpack.c.b16 %v606, %v603
    %v844 = vpack.c.b16 %v610, %v607
    %v845 = vpack.c.b16 %v611, %v608
    %v846 = vpack.c.b16 %v612, %v609
    %v847 = vpack.c.b16 %v616, %v613
    %v848 = vpack.c.b16 %v617, %v614
    %v849 = vpack.c.b16 %v618, %v615
    %v850 = vpack.c.b16 %v622, %v619
    %v851 = vpack.c.b16 %v623, %v620
    %v852 = vpack.c.b16 %v624, %v621
    %v853 = vpack.c.b16 %v628, %v625
    %v854 = vpack.c.b16 %v629, %v626
    %v855 = vpack.c.b16 %v630, %v627
    %v856 = vpack.c.b16 %v634, %v631
    %v857 = vpack.c.b16 %v635, %v632
    %v858 = vpack.c.b16 %v636, %v633
    %v859 = vpack.c.b16 %v640, %v637
    %v860 = vpack.c.b16 %v641, %v638
    %v861 = vpack.c.b16 %v642, %v639
    %v862 = vpack.c.b16 %v646, %v643
    %v863 = vpack.c.b16 %v647, %v644
    %v864 = vpack.c.b16 %v648, %v645
    %v865 = vpack.c.b16 %v652, %v649
    %v866 = vpack.c.b16 %v653, %v650
    %v867 = vpack.c.b16 %v654, %v651
    %v868 = vpack.c.b16 %v658, %v655
    %v869 = vpack.c.b16 %v659, %v656
    %v870 = vpack.c.b16 %v660, %v657
    %v871 = vpack.c.b16 %v664, %v661
    %v872 = vpack.c.b16 %v665, %v662
    %v873 = vpack.c.b16 %v666, %v663
    %v874 = vpack.c.b16 %v670, %v667
    %v875 = vpack.c.b16 %v671, %v668
    %v876 = vpack.c.b16 %v672, %v669
    %v877 = vpack.c.b16 %v676, %v673
    %v878 = vpack.c.b16 %v677, %v674
    %v879 = vpack.c.b16 %v678, %v675
    %v880 = vpack.c.b16 %v682, %v679
    %v881 = vpack.c.b16 %v683, %v680
    %v882 = vpack.c.b16 %v684, %v681
    %v883 = vpack.c.b16 %v688, %v685
    %v884 = vpack.c.b16 %v689, %v686
    %v885 = vpack.c.b16 %v690, %v687
    %v886 = vpack.c.b16 %v694, %v691
    %v887 = vpack.c.b16 %v695, %v692
    %v888 = vpack.c.b16 %v696, %v693
    %v889 = vpack.c.b16 %v700, %v697
    %v890 = vpack.c.b16 %v701, %v698
    %v891 = vpack.c.b16 %v702, %v699
    %v892 = vpack.c.b16 %v706, %v703
    %v893 = vpack.c.b16 %v707, %v704
    %v894 = vpack.c.b16 %v708, %v705
    %v895 = vpack.c.b16 %v712, %v709
    %v896 = vpack.c.b16 %v713, %v710
    %v897 = vpack.c.b16 %v714, %v711
    %v898 = vpack.c.b16 %v718, %v715
    %v899 = vpack.c.b16 %v719, %v716
    %v900 = vpack.c.b16 %v720, %v717
    %v901 = vpack.c.b16 %v724, %v721
    %v902 = vpack.c.b16 %v725, %v722
    %v903 = vpack.c.b16 %v726, %v723
    %v904 = vpack.c.b16 %v730, %v727
    %v905 = vpack.c.b16 %v731, %v728
    %v906 = vpack.c.b16 %v732, %v729
    %v907 = vpack.c.b16 %v736, %v733
    %v908 = vpack.c.b16 %v737, %v734
    %v909 = vpack.c.b16 %v738, %v735
    %v910 = vpack.c.b16 %v742, %v739
    %v911 = vpack.c.b16 %v743, %v740
    %v912 = vpack.c.b16 %v744, %v741
    %v913 = vpack.c.b16 %v748, %v745
    %v914 = vpack.c.b16 %v749, %v746
    %v915 = vpack.c.b16 %v750, %v747
    %v916 = vpack.c.b16 %v754, %v751
    %v917 = vpack.c.b16 %v755, %v752
    %v918 = vpack.c.b16 %v756, %v753
    %v919 = vpack.c.b16 %v760, %v757
    %v920 = vpack.c.b16 %v761, %v758
    %v921 = vpack.c.b16 %v762, %v759
    %v922 = vpack.c.b16 %v766, %v763
    %v923 = vpack.c.b16 %v767, %v764
    %v924 = vpack.c.b16 %v768, %v765
    %v925 = vpack.c.b16 %v772, %v769
    %v926 = vpack.c.b16 %v773, %v770
    %v927 = vpack.c.b16 %v774, %v771
    %v928 = vpack.c.b16 %v778, %v775
    %v929 = vpack.c.b16 %v779, %v776
    %v930 = vpack.c.b16 %v780, %v777
    %v931 = vpack.c.b16 %v784, %v781
    %v932 = vpack.c.b16 %v785, %v782
    %v933 = vpack.c.b16 %v786, %v783
    %v934 = vpack.c.b16 %v790, %v787
    %v935 = vpack.c.b16 %v791, %v788
    %v936 = vpack.c.b16 %v792, %v789
    %1081 = vmatpush.bf16.msra.mxu0 %v814
    %1082 = vmatpush.bf16.msra.mxu0 %v811
    %1083 = vmatpush.bf16.msra.mxu0 %v808
    %1084 = vmatpush.bf16.msra.mxu0 %v805
    %1085 = vmatpush.bf16.msra.mxu0 %v802
    %1086 = vmatpush.bf16.msra.mxu0 %v799
    %1087 = vmatpush.bf16.msra.mxu0 %v796
    %1088 = vmatpush.bf16.msra.mxu0 %v793
    %1089 = vmatmul.bf16.gmra.mxu0 %v107
    %v1090 = vpop.f32.mrf.mxu0
    %v1091 = vadd.f32 %v307, %v1090
    %v1092 = vpop.f32.mrf.mxu0
    %1093 = vdwg.mxu0
    %1094 = vmatpush.bf16.msra.mxu0 %v838
    %1095 = vmatpush.bf16.msra.mxu0 %v835
    %1096 = vmatpush.bf16.msra.mxu0 %v832
    %1097 = vmatpush.bf16.msra.mxu0 %v829
    %1098 = vmatpush.bf16.msra.mxu0 %v826
    %1099 = vmatpush.bf16.msra.mxu0 %v823
    %1100 = vmatpush.bf16.msra.mxu0 %v820
    %1101 = vmatpush.bf16.msra.mxu0 %v817
    %1102 = vmatmul.bf16.gmra.mxu0 %v108
    %v1103 = vpop.f32.mrf.mxu0
    %v1104 = vadd.f32 %v1091, %v1103
    %v1105 = vpop.f32.mrf.mxu0
    %1106 = vdwg.mxu0
    %1107 = vmatpush.bf16.msra.mxu0 %v862
    %1108 = vmatpush.bf16.msra.mxu0 %v859
    %1109 = vmatpush.bf16.msra.mxu0 %v856
    %1110 = vmatpush.bf16.msra.mxu0 %v853
    %1111 = vmatpush.bf16.msra.mxu0 %v850
    %1112 = vmatpush.bf16.msra.mxu0 %v847
    %1113 = vmatpush.bf16.msra.mxu0 %v844
    %1114 = vmatpush.bf16.msra.mxu0 %v841
    %1115 = vmatmul.bf16.gmra.mxu0 %v109
    %v1116 = vpop.f32.mrf.mxu0
    %v1117 = vadd.f32 %v1104, %v1116
    %v1118 = vpop.f32.mrf.mxu0
    %1119 = vdwg.mxu0
    %1120 = vmatpush.bf16.msra.mxu0 %v886
    %1121 = vmatpush.bf16.msra.mxu0 %v883
    %1122 = vmatpush.bf16.msra.mxu0 %v880
    %1123 = vmatpush.bf16.msra.mxu0 %v877
    %1124 = vmatpush.bf16.msra.mxu0 %v874
    %1125 = vmatpush.bf16.msra.mxu0 %v871
    %1126 = vmatpush.bf16.msra.mxu0 %v868
    %1127 = vmatpush.bf16.msra.mxu0 %v865
    %1128 = vmatmul.bf16.gmra.mxu0 %v110
    %v1129 = vpop.f32.mrf.mxu0
    %v1130 = vadd.f32 %v1117, %v1129
    %v1131 = vpop.f32.mrf.mxu0
    %1132 = vdwg.mxu0
    %1133 = vmatpush.bf16.msra.mxu0 %v910
    %1134 = vmatpush.bf16.msra.mxu0 %v907
    %1135 = vmatpush.bf16.msra.mxu0 %v904
    %1136 = vmatpush.bf16.msra.mxu0 %v901
    %1137 = vmatpush.bf16.msra.mxu0 %v898
    %1138 = vmatpush.bf16.msra.mxu0 %v895
    %1139 = vmatpush.bf16.msra.mxu0 %v892
    %1140 = vmatpush.bf16.msra.mxu0 %v889
    %1141 = vmatmul.bf16.gmra.mxu0 %v111
    %v1142 = vpop.f32.mrf.mxu0
    %v1143 = vadd.f32 %v1130, %v1142
    %v1144 = vpop.f32.mrf.mxu0
    %1145 = vdwg.mxu0
    %1146 = vmatpush.bf16.msra.mxu0 %v934
    %1147 = vmatpush.bf16.msra.mxu0 %v931
    %1148 = vmatpush.bf16.msra.mxu0 %v928
    %1149 = vmatpush.bf16.msra.mxu0 %v925
    %1150 = vmatpush.bf16.msra.mxu0 %v922
    %1151 = vmatpush.bf16.msra.mxu0 %v919
    %1152 = vmatpush.bf16.msra.mxu0 %v916
    %1153 = vmatpush.bf16.msra.mxu0 %v913
    %1154 = vmatmul.bf16.gmra.mxu0 %v112
    %v1155 = vpop.f32.mrf.mxu0
    %v1156 = vadd.f32 %v1143, %v1155
    %v1157 = vpop.f32.mrf.mxu0
    %1158 = vdwg.mxu0
    %1159 = vmatpush.bf16.msra.mxu0 %v815
    %1160 = vmatpush.bf16.msra.mxu0 %v812
    %1161 = vmatpush.bf16.msra.mxu0 %v809
    %1162 = vmatpush.bf16.msra.mxu0 %v806
    %1163 = vmatpush.bf16.msra.mxu0 %v803
    %1164 = vmatpush.bf16.msra.mxu0 %v800
    %1165 = vmatpush.bf16.msra.mxu0 %v797
    %1166 = vmatpush.bf16.msra.mxu0 %v794
    %1167 = vmatmul.bf16.gmra.mxu0 %v107
    %v1168 = vpop.f32.mrf.mxu0
    %v1169 = vadd.f32 %v308, %v1168
    %v1170 = vpop.f32.mrf.mxu0
    %1171 = vdwg.mxu0
    %1172 = vmatpush.bf16.msra.mxu0 %v839
    %1173 = vmatpush.bf16.msra.mxu0 %v836
    %1174 = vmatpush.bf16.msra.mxu0 %v833
    %1175 = vmatpush.bf16.msra.mxu0 %v830
    %1176 = vmatpush.bf16.msra.mxu0 %v827
    %1177 = vmatpush.bf16.msra.mxu0 %v824
    %1178 = vmatpush.bf16.msra.mxu0 %v821
    %1179 = vmatpush.bf16.msra.mxu0 %v818
    %1180 = vmatmul.bf16.gmra.mxu0 %v108
    %v1181 = vpop.f32.mrf.mxu0
    %v1182 = vadd.f32 %v1169, %v1181
    %v1183 = vpop.f32.mrf.mxu0
    %1184 = vdwg.mxu0
    %1185 = vmatpush.bf16.msra.mxu0 %v863
    %1186 = vmatpush.bf16.msra.mxu0 %v860
    %1187 = vmatpush.bf16.msra.mxu0 %v857
    %1188 = vmatpush.bf16.msra.mxu0 %v854
    %1189 = vmatpush.bf16.msra.mxu0 %v851
    %1190 = vmatpush.bf16.msra.mxu0 %v848
    %1191 = vmatpush.bf16.msra.mxu0 %v845
    %1192 = vmatpush.bf16.msra.mxu0 %v842
    %1193 = vmatmul.bf16.gmra.mxu0 %v109
    %v1194 = vpop.f32.mrf.mxu0
    %v1195 = vadd.f32 %v1182, %v1194
    %v1196 = vpop.f32.mrf.mxu0
    %1197 = vdwg.mxu0
    %1198 = vmatpush.bf16.msra.mxu0 %v887
    %1199 = vmatpush.bf16.msra.mxu0 %v884
    %1200 = vmatpush.bf16.msra.mxu0 %v881
    %1201 = vmatpush.bf16.msra.mxu0 %v878
    %1202 = vmatpush.bf16.msra.mxu0 %v875
    %1203 = vmatpush.bf16.msra.mxu0 %v872
    %1204 = vmatpush.bf16.msra.mxu0 %v869
    %1205 = vmatpush.bf16.msra.mxu0 %v866
    %1206 = vmatmul.bf16.gmra.mxu0 %v110
    %v1207 = vpop.f32.mrf.mxu0
    %v1208 = vadd.f32 %v1195, %v1207
    %v1209 = vpop.f32.mrf.mxu0
    %1210 = vdwg.mxu0
    %1211 = vmatpush.bf16.msra.mxu0 %v911
    %1212 = vmatpush.bf16.msra.mxu0 %v908
    %1213 = vmatpush.bf16.msra.mxu0 %v905
    %1214 = vmatpush.bf16.msra.mxu0 %v902
    %1215 = vmatpush.bf16.msra.mxu0 %v899
    %1216 = vmatpush.bf16.msra.mxu0 %v896
    %1217 = vmatpush.bf16.msra.mxu0 %v893
    %1218 = vmatpush.bf16.msra.mxu0 %v890
    %1219 = vmatmul.bf16.gmra.mxu0 %v111
    %v1220 = vpop.f32.mrf.mxu0
    %v1221 = vadd.f32 %v1208, %v1220
    %v1222 = vpop.f32.mrf.mxu0
    %1223 = vdwg.mxu0
    %1224 = vmatpush.bf16.msra.mxu0 %v935
    %1225 = vmatpush.bf16.msra.mxu0 %v932
    %1226 = vmatpush.bf16.msra.mxu0 %v929
    %1227 = vmatpush.bf16.msra.mxu0 %v926
    %1228 = vmatpush.bf16.msra.mxu0 %v923
    %1229 = vmatpush.bf16.msra.mxu0 %v920
    %1230 = vmatpush.bf16.msra.mxu0 %v917
    %1231 = vmatpush.bf16.msra.mxu0 %v914
    %1232 = vmatmul.bf16.gmra.mxu0 %v112
    %v1233 = vpop.f32.mrf.mxu0
    %v1234 = vadd.f32 %v1221, %v1233
    %v1235 = vpop.f32.mrf.mxu0
    %1236 = vdwg.mxu0
    %1237 = vmatpush.bf16.msra.mxu0 %v816
    %1238 = vmatpush.bf16.msra.mxu0 %v813
    %1239 = vmatpush.bf16.msra.mxu0 %v810
    %1240 = vmatpush.bf16.msra.mxu0 %v807
    %1241 = vmatpush.bf16.msra.mxu0 %v804
    %1242 = vmatpush.bf16.msra.mxu0 %v801
    %1243 = vmatpush.bf16.msra.mxu0 %v798
    %1244 = vmatpush.bf16.msra.mxu0 %v795
    %1245 = vmatmul.bf16.gmra.mxu0 %v107
    %v1246 = vpop.f32.mrf.mxu0
    %v1247 = vadd.f32 %v309, %v1246
    %v1248 = vpop.f32.mrf.mxu0
    %1249 = vdwg.mxu0
    %1250 = vmatpush.bf16.msra.mxu0 %v840
    %1251 = vmatpush.bf16.msra.mxu0 %v837
    %1252 = vmatpush.bf16.msra.mxu0 %v834
    %1253 = vmatpush.bf16.msra.mxu0 %v831
    %1254 = vmatpush.bf16.msra.mxu0 %v828
    %1255 = vmatpush.bf16.msra.mxu0 %v825
    %1256 = vmatpush.bf16.msra.mxu0 %v822
    %1257 = vmatpush.bf16.msra.mxu0 %v819
    %1258 = vmatmul.bf16.gmra.mxu0 %v108
    %v1259 = vpop.f32.mrf.mxu0
    %v1260 = vadd.f32 %v1247, %v1259
    %v1261 = vpop.f32.mrf.mxu0
    %1262 = vdwg.mxu0
    %1263 = vmatpush.bf16.msra.mxu0 %v864
    %1264 = vmatpush.bf16.msra.mxu0 %v861
    %1265 = vmatpush.bf16.msra.mxu0 %v858
    %1266 = vmatpush.bf16.msra.mxu0 %v855
    %1267 = vmatpush.bf16.msra.mxu0 %v852
    %1268 = vmatpush.bf16.msra.mxu0 %v849
    %1269 = vmatpush.bf16.msra.mxu0 %v846
    %1270 = vmatpush.bf16.msra.mxu0 %v843
    %1271 = vmatmul.bf16.gmra.mxu0 %v109
    %v1272 = vpop.f32.mrf.mxu0
    %v1273 = vadd.f32 %v1260, %v1272
    %v1274 = vpop.f32.mrf.mxu0
    %1275 = vdwg.mxu0
    %1276 = vmatpush.bf16.msra.mxu0 %v888
    %1277 = vmatpush.bf16.msra.mxu0 %v885
    %1278 = vmatpush.bf16.msra.mxu0 %v882
    %1279 = vmatpush.bf16.msra.mxu0 %v879
    %1280 = vmatpush.bf16.msra.mxu0 %v876
    %1281 = vmatpush.bf16.msra.mxu0 %v873
    %1282 = vmatpush.bf16.msra.mxu0 %v870
    %1283 = vmatpush.bf16.msra.mxu0 %v867
    %1284 = vmatmul.bf16.gmra.mxu0 %v110
    %v1285 = vpop.f32.mrf.mxu0
    %v1286 = vadd.f32 %v1273, %v1285
    %v1287 = vpop.f32.mrf.mxu0
    %1288 = vdwg.mxu0
    %1289 = vmatpush.bf16.msra.mxu0 %v912
    %1290 = vmatpush.bf16.msra.mxu0 %v909
    %1291 = vmatpush.bf16.msra.mxu0 %v906
    %1292 = vmatpush.bf16.msra.mxu0 %v903
    %1293 = vmatpush.bf16.msra.mxu0 %v900
    %1294 = vmatpush.bf16.msra.mxu0 %v897
    %1295 = vmatpush.bf16.msra.mxu0 %v894
    %1296 = vmatpush.bf16.msra.mxu0 %v891
    %1297 = vmatmul.bf16.gmra.mxu0 %v111
    %v1298 = vpop.f32.mrf.mxu0
    %v1299 = vadd.f32 %v1286, %v1298
    %v1300 = vpop.f32.mrf.mxu0
    %1301 = vdwg.mxu0
    %1302 = vmatpush.bf16.msra.mxu0 %v936
    %1303 = vmatpush.bf16.msra.mxu0 %v933
    %1304 = vmatpush.bf16.msra.mxu0 %v930
    %1305 = vmatpush.bf16.msra.mxu0 %v927
    %1306 = vmatpush.bf16.msra.mxu0 %v924
    %1307 = vmatpush.bf16.msra.mxu0 %v921
    %1308 = vmatpush.bf16.msra.mxu0 %v918
    %1309 = vmatpush.bf16.msra.mxu0 %v915
    %1310 = vmatmul.bf16.gmra.mxu0 %v112
    %v1311 = vpop.f32.mrf.mxu0
    %v1312 = vadd.f32 %v1299, %v1311
    %v1313 = vpop.f32.mrf.mxu0
    %1314 = vdwg.mxu0
    %vm1315 = vcmp.gt.f32.partialorder %v1156, 0.0
    %vm1316 = vcmp.gt.f32.partialorder %v1234, 0.0
    %vm1317 = vcmp.gt.f32.partialorder %v1312, 0.0
    %v1318 = vmul.f32 %v1156, 0.2
    %v1319 = vmul.f32 %v1234, 0.2
    %v1320 = vmul.f32 %v1312, 0.2
    %v1321 = vsel %vm1315, %v1156, %v1318
    %v1322 = vsel %vm1316, %v1234, %v1319
    %v1323 = vsel %vm1317, %v1312, %v1320
    %v1324 = vpack.c.bf16 %v1321, %v1321
    %v1325 = vpack.c.bf16 %v1322, %v1322
    %v1326 = vpack.c.bf16 %v1323, %v1323
    %v1327 = vld [vmem:[#allocation5] sm:$0xff]
    %v1328 = vld [vmem:[#allocation5 + $0x8] sm:$0xff]
    %v1329 = vld [vmem:[#allocation5 + $0x10] sm:$0xff]
    %v1330 = vld [vmem:[#allocation5 + $0x18] sm:$0xff]
    %v1331 = vld [vmem:[#allocation5 + $0x20] sm:$0xff]
    %v1332 = vld [vmem:[#allocation5 + $0x28] sm:$0xff]
    %v1333 = vld [vmem:[#allocation5 + $0x30] sm:$0xff]
    %v1334 = vld [vmem:[#allocation5 + $0x38] sm:$0xff]
    %v1335 = vld [vmem:[#allocation5 + $0x40] sm:$0xff]
    %v1336 = vld [vmem:[#allocation5 + $0x48] sm:$0xff]
    %v1337 = vld [vmem:[#allocation5 + $0x50] sm:$0xff]
    %v1338 = vld [vmem:[#allocation5 + $0x58] sm:$0xff]
    %v1339 = vld [vmem:[#allocation5 + $0x60] sm:$0xff]
    %v1340 = vld [vmem:[#allocation5 + $0x68] sm:$0xff]
    %v1341 = vld [vmem:[#allocation5 + $0x70] sm:$0xff]
    %v1342 = vld [vmem:[#allocation5 + $0x78] sm:$0xff]
    %v1343 = vld [vmem:[#allocation5 + $0x80] sm:$0xff]
    %v1344 = vld [vmem:[#allocation5 + $0x88] sm:$0xff]
    %v1345 = vld [vmem:[#allocation5 + $0x90] sm:$0xff]
    %v1346 = vld [vmem:[#allocation5 + $0x98] sm:$0xff]
    %v1347 = vld [vmem:[#allocation5 + $0xa0] sm:$0xff]
    %v1348 = vld [vmem:[#allocation5 + $0xa8] sm:$0xff]
    %v1349 = vld [vmem:[#allocation5 + $0xb0] sm:$0xff]
    %v1350 = vld [vmem:[#allocation5 + $0xb8] sm:$0xff]
    %v1351 = vld [vmem:[#allocation5 + $0xc0] sm:$0xff]
    %v1352 = vld [vmem:[#allocation5 + $0xc8] sm:$0xff]
    %v1353 = vld [vmem:[#allocation5 + $0xd0] sm:$0xff]
    %v1354 = vld [vmem:[#allocation5 + $0xd8] sm:$0xff]
    %v1355 = vld [vmem:[#allocation5 + $0xe0] sm:$0xff]
    %v1356 = vld [vmem:[#allocation5 + $0xe8] sm:$0xff]
    %v1357 = vld [vmem:[#allocation5 + $0xf0] sm:$0xff]
    %v1358 = vld [vmem:[#allocation5 + $0xf8] sm:$0xff]
    %v1359 = vld [vmem:[#allocation5 + $0x100] sm:$0xff]
    %v1360 = vld [vmem:[#allocation5 + $0x108] sm:$0xff]
    %v1361 = vld [vmem:[#allocation5 + $0x110] sm:$0xff]
    %v1362 = vld [vmem:[#allocation5 + $0x118] sm:$0xff]
    %v1363 = vld [vmem:[#allocation5 + $0x120] sm:$0xff]
    %v1364 = vld [vmem:[#allocation5 + $0x128] sm:$0xff]
    %v1365 = vld [vmem:[#allocation5 + $0x130] sm:$0xff]
    %v1366 = vld [vmem:[#allocation5 + $0x138] sm:$0xff]
    %v1367 = vld [vmem:[#allocation5 + $0x140] sm:$0xff]
    %v1368 = vld [vmem:[#allocation5 + $0x148] sm:$0xff]
    %v1369 = vld [vmem:[#allocation5 + $0x150] sm:$0xff]
    %v1370 = vld [vmem:[#allocation5 + $0x158] sm:$0xff]
    %v1371 = vld [vmem:[#allocation5 + $0x160] sm:$0xff]
    %v1372 = vld [vmem:[#allocation5 + $0x168] sm:$0xff]
    %v1373 = vld [vmem:[#allocation5 + $0x170] sm:$0xff]
    %v1374 = vld [vmem:[#allocation5 + $0x178] sm:$0xff]
    %v1375 = vld [vmem:[%s5] sm:$0x3]
    %v1377 = vperm.slane %v1375, 0
    %v1378 = vperm.slane %v1375, 1
    %v1429 = vunpack.c.l.b16 %v1327
    %v1430 = vunpack.c.h.b16 %v1327
    %v1431 = vunpack.c.l.b16 %v1328
    %v1432 = vunpack.c.h.b16 %v1328
    %v1433 = vunpack.c.l.b16 %v1329
    %v1434 = vunpack.c.h.b16 %v1329
    %v1435 = vunpack.c.l.b16 %v1330
    %v1436 = vunpack.c.h.b16 %v1330
    %v1437 = vunpack.c.l.b16 %v1331
    %v1438 = vunpack.c.h.b16 %v1331
    %v1439 = vunpack.c.l.b16 %v1332
    %v1440 = vunpack.c.h.b16 %v1332
    %v1441 = vunpack.c.l.b16 %v1333
    %v1442 = vunpack.c.h.b16 %v1333
    %v1443 = vunpack.c.l.b16 %v1334
    %v1444 = vunpack.c.h.b16 %v1334
    %v1445 = vunpack.c.l.b16 %v1335
    %v1446 = vunpack.c.h.b16 %v1335
    %v1447 = vunpack.c.l.b16 %v1336
    %v1448 = vunpack.c.h.b16 %v1336
    %v1449 = vunpack.c.l.b16 %v1337
    %v1450 = vunpack.c.h.b16 %v1337
    %v1451 = vunpack.c.l.b16 %v1338
    %v1452 = vunpack.c.h.b16 %v1338
    %v1453 = vunpack.c.l.b16 %v1339
    %v1454 = vunpack.c.h.b16 %v1339
    %v1455 = vunpack.c.l.b16 %v1340
    %v1456 = vunpack.c.h.b16 %v1340
    %v1457 = vunpack.c.l.b16 %v1341
    %v1458 = vunpack.c.h.b16 %v1341
    %v1459 = vunpack.c.l.b16 %v1342
    %v1460 = vunpack.c.h.b16 %v1342
    %v1461 = vunpack.c.l.b16 %v1343
    %v1462 = vunpack.c.h.b16 %v1343
    %v1463 = vunpack.c.l.b16 %v1344
    %v1464 = vunpack.c.h.b16 %v1344
    %v1465 = vunpack.c.l.b16 %v1345
    %v1466 = vunpack.c.h.b16 %v1345
    %v1467 = vunpack.c.l.b16 %v1346
    %v1468 = vunpack.c.h.b16 %v1346
    %v1469 = vunpack.c.l.b16 %v1347
    %v1470 = vunpack.c.h.b16 %v1347
    %v1471 = vunpack.c.l.b16 %v1348
    %v1472 = vunpack.c.h.b16 %v1348
    %v1473 = vunpack.c.l.b16 %v1349
    %v1474 = vunpack.c.h.b16 %v1349
    %v1475 = vunpack.c.l.b16 %v1350
    %v1476 = vunpack.c.h.b16 %v1350
    %v1477 = vunpack.c.l.b16 %v1351
    %v1478 = vunpack.c.h.b16 %v1351
    %v1479 = vunpack.c.l.b16 %v1352
    %v1480 = vunpack.c.h.b16 %v1352
    %v1481 = vunpack.c.l.b16 %v1353
    %v1482 = vunpack.c.h.b16 %v1353
    %v1483 = vunpack.c.l.b16 %v1354
    %v1484 = vunpack.c.h.b16 %v1354
    %v1485 = vunpack.c.l.b16 %v1355
    %v1486 = vunpack.c.h.b16 %v1355
    %v1487 = vunpack.c.l.b16 %v1356
    %v1488 = vunpack.c.h.b16 %v1356
    %v1489 = vunpack.c.l.b16 %v1357
    %v1490 = vunpack.c.h.b16 %v1357
    %v1491 = vunpack.c.l.b16 %v1358
    %v1492 = vunpack.c.h.b16 %v1358
    %v1493 = vunpack.c.l.b16 %v1359
    %v1494 = vunpack.c.h.b16 %v1359
    %v1495 = vunpack.c.l.b16 %v1360
    %v1496 = vunpack.c.h.b16 %v1360
    %v1497 = vunpack.c.l.b16 %v1361
    %v1498 = vunpack.c.h.b16 %v1361
    %v1499 = vunpack.c.l.b16 %v1362
    %v1500 = vunpack.c.h.b16 %v1362
    %v1501 = vunpack.c.l.b16 %v1363
    %v1502 = vunpack.c.h.b16 %v1363
    %v1503 = vunpack.c.l.b16 %v1364
    %v1504 = vunpack.c.h.b16 %v1364
    %v1505 = vunpack.c.l.b16 %v1365
    %v1506 = vunpack.c.h.b16 %v1365
    %v1507 = vunpack.c.l.b16 %v1366
    %v1508 = vunpack.c.h.b16 %v1366
    %v1509 = vunpack.c.l.b16 %v1367
    %v1510 = vunpack.c.h.b16 %v1367
    %v1511 = vunpack.c.l.b16 %v1368
    %v1512 = vunpack.c.h.b16 %v1368
    %v1513 = vunpack.c.l.b16 %v1369
    %v1514 = vunpack.c.h.b16 %v1369
    %v1515 = vunpack.c.l.b16 %v1370
    %v1516 = vunpack.c.h.b16 %v1370
    %v1517 = vunpack.c.l.b16 %v1371
    %v1518 = vunpack.c.h.b16 %v1371
    %v1519 = vunpack.c.l.b16 %v1372
    %v1520 = vunpack.c.h.b16 %v1372
    %v1521 = vunpack.c.l.b16 %v1373
    %v1522 = vunpack.c.h.b16 %v1373
    %v1523 = vunpack.c.l.b16 %v1374
    %v1524 = vunpack.c.h.b16 %v1374
    %v1525 = vpack.c.b16 %v1431, %v1429
    %v1526 = vpack.c.b16 %v1432, %v1430
    %v1527 = vpack.c.b16 %v1435, %v1433
    %v1528 = vpack.c.b16 %v1436, %v1434
    %v1529 = vpack.c.b16 %v1439, %v1437
    %v1530 = vpack.c.b16 %v1440, %v1438
    %v1531 = vpack.c.b16 %v1443, %v1441
    %v1532 = vpack.c.b16 %v1444, %v1442
    %v1533 = vpack.c.b16 %v1447, %v1445
    %v1534 = vpack.c.b16 %v1448, %v1446
    %v1535 = vpack.c.b16 %v1451, %v1449
    %v1536 = vpack.c.b16 %v1452, %v1450
    %v1537 = vpack.c.b16 %v1455, %v1453
    %v1538 = vpack.c.b16 %v1456, %v1454
    %v1539 = vpack.c.b16 %v1459, %v1457
    %v1540 = vpack.c.b16 %v1460, %v1458
    %v1541 = vpack.c.b16 %v1463, %v1461
    %v1542 = vpack.c.b16 %v1464, %v1462
    %v1543 = vpack.c.b16 %v1467, %v1465
    %v1544 = vpack.c.b16 %v1468, %v1466
    %v1545 = vpack.c.b16 %v1471, %v1469
    %v1546 = vpack.c.b16 %v1472, %v1470
    %v1547 = vpack.c.b16 %v1475, %v1473
    %v1548 = vpack.c.b16 %v1476, %v1474
    %v1549 = vpack.c.b16 %v1479, %v1477
    %v1550 = vpack.c.b16 %v1480, %v1478
    %v1551 = vpack.c.b16 %v1483, %v1481
    %v1552 = vpack.c.b16 %v1484, %v1482
    %v1553 = vpack.c.b16 %v1487, %v1485
    %v1554 = vpack.c.b16 %v1488, %v1486
    %v1555 = vpack.c.b16 %v1491, %v1489
    %v1556 = vpack.c.b16 %v1492, %v1490
    %v1557 = vpack.c.b16 %v1495, %v1493
    %v1558 = vpack.c.b16 %v1496, %v1494
    %v1559 = vpack.c.b16 %v1499, %v1497
    %v1560 = vpack.c.b16 %v1500, %v1498
    %v1561 = vpack.c.b16 %v1503, %v1501
    %v1562 = vpack.c.b16 %v1504, %v1502
    %v1563 = vpack.c.b16 %v1507, %v1505
    %v1564 = vpack.c.b16 %v1508, %v1506
    %v1565 = vpack.c.b16 %v1511, %v1509
    %v1566 = vpack.c.b16 %v1512, %v1510
    %v1567 = vpack.c.b16 %v1515, %v1513
    %v1568 = vpack.c.b16 %v1516, %v1514
    %v1569 = vpack.c.b16 %v1519, %v1517
    %v1570 = vpack.c.b16 %v1520, %v1518
    %v1571 = vpack.c.b16 %v1523, %v1521
    %v1572 = vpack.c.b16 %v1524, %v1522
    %1621 = vmatpush.bf16.msra.mxu0 %v1539
    %1622 = vmatpush.bf16.msra.mxu0 %v1537
    %1623 = vmatpush.bf16.msra.mxu0 %v1535
    %1624 = vmatpush.bf16.msra.mxu0 %v1533
    %1625 = vmatpush.bf16.msra.mxu0 %v1531
    %1626 = vmatpush.bf16.msra.mxu0 %v1529
    %1627 = vmatpush.bf16.msra.mxu0 %v1527
    %1628 = vmatpush.bf16.msra.mxu0 %v1525
    %1629 = vmatmul.bf16.gmra.mxu0 %v1324
    %v1630 = vpop.f32.mrf.mxu0
    %v1631 = vadd.f32 %v1377, %v1630
    %v1632 = vpop.f32.mrf.mxu0
    %1633 = vdwg.mxu0
    %1634 = vmatpush.bf16.msra.mxu0 %v1555
    %1635 = vmatpush.bf16.msra.mxu0 %v1553
    %1636 = vmatpush.bf16.msra.mxu0 %v1551
    %1637 = vmatpush.bf16.msra.mxu0 %v1549
    %1638 = vmatpush.bf16.msra.mxu0 %v1547
    %1639 = vmatpush.bf16.msra.mxu0 %v1545
    %1640 = vmatpush.bf16.msra.mxu0 %v1543
    %1641 = vmatpush.bf16.msra.mxu0 %v1541
    %1642 = vmatmul.bf16.gmra.mxu0 %v1325
    %v1643 = vpop.f32.mrf.mxu0
    %v1644 = vadd.f32 %v1631, %v1643
    %v1645 = vpop.f32.mrf.mxu0
    %1646 = vdwg.mxu0
    %1647 = vmatpush.bf16.msra.mxu0 %v1571
    %1648 = vmatpush.bf16.msra.mxu0 %v1569
    %1649 = vmatpush.bf16.msra.mxu0 %v1567
    %1650 = vmatpush.bf16.msra.mxu0 %v1565
    %1651 = vmatpush.bf16.msra.mxu0 %v1563
    %1652 = vmatpush.bf16.msra.mxu0 %v1561
    %1653 = vmatpush.bf16.msra.mxu0 %v1559
    %1654 = vmatpush.bf16.msra.mxu0 %v1557
    %1655 = vmatmul.bf16.gmra.mxu0 %v1326
    %v1656 = vpop.f32.mrf.mxu0
    %v1657 = vadd.f32 %v1644, %v1656
    %v1658 = vpop.f32.mrf.mxu0
    %1659 = vdwg.mxu0
    %1660 = vmatpush.bf16.msra.mxu0 %v1540
    %1661 = vmatpush.bf16.msra.mxu0 %v1538
    %1662 = vmatpush.bf16.msra.mxu0 %v1536
    %1663 = vmatpush.bf16.msra.mxu0 %v1534
    %1664 = vmatpush.bf16.msra.mxu0 %v1532
    %1665 = vmatpush.bf16.msra.mxu0 %v1530
    %1666 = vmatpush.bf16.msra.mxu0 %v1528
    %1667 = vmatpush.bf16.msra.mxu0 %v1526
    %1668 = vmatmul.bf16.gmra.mxu0 %v1324
    %v1669 = vpop.f32.mrf.mxu0
    %v1670 = vadd.f32 %v1378, %v1669
    %v1671 = vpop.f32.mrf.mxu0
    %1672 = vdwg.mxu0
    %1673 = vmatpush.bf16.msra.mxu0 %v1556
    %1674 = vmatpush.bf16.msra.mxu0 %v1554
    %1675 = vmatpush.bf16.msra.mxu0 %v1552
    %1676 = vmatpush.bf16.msra.mxu0 %v1550
    %1677 = vmatpush.bf16.msra.mxu0 %v1548
    %1678 = vmatpush.bf16.msra.mxu0 %v1546
    %1679 = vmatpush.bf16.msra.mxu0 %v1544
    %1680 = vmatpush.bf16.msra.mxu0 %v1542
    %1681 = vmatmul.bf16.gmra.mxu0 %v1325
    %v1682 = vpop.f32.mrf.mxu0
    %v1683 = vadd.f32 %v1670, %v1682
    %v1684 = vpop.f32.mrf.mxu0
    %1685 = vdwg.mxu0
    %1686 = vmatpush.bf16.msra.mxu0 %v1572
    %1687 = vmatpush.bf16.msra.mxu0 %v1570
    %1688 = vmatpush.bf16.msra.mxu0 %v1568
    %1689 = vmatpush.bf16.msra.mxu0 %v1566
    %1690 = vmatpush.bf16.msra.mxu0 %v1564
    %1691 = vmatpush.bf16.msra.mxu0 %v1562
    %1692 = vmatpush.bf16.msra.mxu0 %v1560
    %1693 = vmatpush.bf16.msra.mxu0 %v1558
    %1694 = vmatmul.bf16.gmra.mxu0 %v1326
    %v1695 = vpop.f32.mrf.mxu0
    %v1696 = vadd.f32 %v1683, %v1695
    %v1697 = vpop.f32.mrf.mxu0
    %1698 = vdwg.mxu0
    %v1699 = vpack.c.bf16 %v1657, %v1657
    %v1700 = vpack.c.bf16 %v1696, %v1696
    %v1701 = vld [vmem:[#allocation7] sm:$0xff]
    %v1702 = vld [vmem:[#allocation7 + $0x8] sm:$0xff]
    %v1703 = vld [vmem:[#allocation7 + $0x10] sm:$0xff]
    %v1704 = vld [vmem:[#allocation7 + $0x18] sm:$0xff]
    %v1705 = vld [vmem:[#allocation7 + $0x20] sm:$0xff]
    %v1706 = vld [vmem:[#allocation7 + $0x28] sm:$0xff]
    %v1707 = vld [vmem:[#allocation7 + $0x30] sm:$0xff]
    %v1708 = vld [vmem:[#allocation7 + $0x38] sm:$0xff]
    %v1709 = vld [vmem:[#allocation7 + $0x40] sm:$0xff]
    %v1710 = vld [vmem:[#allocation7 + $0x48] sm:$0xff]
    %v1711 = vld [vmem:[#allocation7 + $0x50] sm:$0xff]
    %v1712 = vld [vmem:[#allocation7 + $0x58] sm:$0xff]
    %v1713 = vld [vmem:[#allocation7 + $0x60] sm:$0xff]
    %v1714 = vld [vmem:[#allocation7 + $0x68] sm:$0xff]
    %v1715 = vld [vmem:[#allocation7 + $0x70] sm:$0xff]
    %v1716 = vld [vmem:[#allocation7 + $0x78] sm:$0xff]
    %v1717 = vld [vmem:[#allocation7 + $0x80] sm:$0xff]
    %v1718 = vld [vmem:[#allocation7 + $0x88] sm:$0xff]
    %v1719 = vld [vmem:[#allocation7 + $0x90] sm:$0xff]
    %v1720 = vld [vmem:[#allocation7 + $0x98] sm:$0xff]
    %v1721 = vld [vmem:[#allocation7 + $0xa0] sm:$0xff]
    %v1722 = vld [vmem:[#allocation7 + $0xa8] sm:$0xff]
    %v1723 = vld [vmem:[#allocation7 + $0xb0] sm:$0xff]
    %v1724 = vld [vmem:[#allocation7 + $0xb8] sm:$0xff]
    %v1725 = vld [vmem:[#allocation7 + $0xc0] sm:$0xff]
    %v1726 = vld [vmem:[#allocation7 + $0xc8] sm:$0xff]
    %v1727 = vld [vmem:[#allocation7 + $0xd0] sm:$0xff]
    %v1728 = vld [vmem:[#allocation7 + $0xd8] sm:$0xff]
    %v1729 = vld [vmem:[#allocation7 + $0xe0] sm:$0xff]
    %v1730 = vld [vmem:[#allocation7 + $0xe8] sm:$0xff]
    %v1731 = vld [vmem:[#allocation7 + $0xf0] sm:$0xff]
    %v1732 = vld [vmem:[#allocation7 + $0xf8] sm:$0xff]
    %v1733 = vld [vmem:[#allocation7 + $0x100] sm:$0xff]
    %v1734 = vld [vmem:[#allocation7 + $0x108] sm:$0xff]
    %v1735 = vld [vmem:[#allocation7 + $0x110] sm:$0xff]
    %v1736 = vld [vmem:[#allocation7 + $0x118] sm:$0xff]
    %v1737 = vld [vmem:[#allocation7 + $0x120] sm:$0xff]
    %v1738 = vld [vmem:[#allocation7 + $0x128] sm:$0xff]
    %v1739 = vld [vmem:[#allocation7 + $0x130] sm:$0xff]
    %v1740 = vld [vmem:[#allocation7 + $0x138] sm:$0xff]
    %v1741 = vld [vmem:[#allocation7 + $0x140] sm:$0xff]
    %v1742 = vld [vmem:[#allocation7 + $0x148] sm:$0xff]
    %v1743 = vld [vmem:[#allocation7 + $0x150] sm:$0xff]
    %v1744 = vld [vmem:[#allocation7 + $0x158] sm:$0xff]
    %v1745 = vld [vmem:[#allocation7 + $0x160] sm:$0xff]
    %v1746 = vld [vmem:[#allocation7 + $0x168] sm:$0xff]
    %v1747 = vld [vmem:[#allocation7 + $0x170] sm:$0xff]
    %v1748 = vld [vmem:[#allocation7 + $0x178] sm:$0xff]
    %v1749 = vld [vmem:[#allocation7 + $0x180] sm:$0xff]
    %v1750 = vld [vmem:[#allocation7 + $0x188] sm:$0xff]
    %v1751 = vld [vmem:[#allocation7 + $0x190] sm:$0xff]
    %v1752 = vld [vmem:[#allocation7 + $0x198] sm:$0xff]
    %v1753 = vld [vmem:[#allocation7 + $0x1a0] sm:$0xff]
    %v1754 = vld [vmem:[#allocation7 + $0x1a8] sm:$0xff]
    %v1755 = vld [vmem:[#allocation7 + $0x1b0] sm:$0xff]
    %v1756 = vld [vmem:[#allocation7 + $0x1b8] sm:$0xff]
    %v1757 = vld [vmem:[#allocation7 + $0x1c0] sm:$0xff]
    %v1758 = vld [vmem:[#allocation7 + $0x1c8] sm:$0xff]
    %v1759 = vld [vmem:[#allocation7 + $0x1d0] sm:$0xff]
    %v1760 = vld [vmem:[#allocation7 + $0x1d8] sm:$0xff]
    %v1761 = vld [vmem:[#allocation7 + $0x1e0] sm:$0xff]
    %v1762 = vld [vmem:[#allocation7 + $0x1e8] sm:$0xff]
    %v1763 = vld [vmem:[#allocation7 + $0x1f0] sm:$0xff]
    %v1764 = vld [vmem:[#allocation7 + $0x1f8] sm:$0xff]
    %v1765 = vld [vmem:[%s7] sm:$0xf]
    %v1767 = vperm.slane %v1765, 0
    %v1768 = vperm.slane %v1765, 1
    %v1769 = vperm.slane %v1765, 2
    %v1770 = vperm.slane %v1765, 3
    %v1839 = vunpack.c.l.b16 %v1701
    %v1840 = vunpack.c.h.b16 %v1701
    %v1841 = vunpack.c.l.b16 %v1702
    %v1842 = vunpack.c.h.b16 %v1702
    %v1843 = vunpack.c.l.b16 %v1703
    %v1844 = vunpack.c.h.b16 %v1703
    %v1845 = vunpack.c.l.b16 %v1704
    %v1846 = vunpack.c.h.b16 %v1704
    %v1847 = vunpack.c.l.b16 %v1705
    %v1848 = vunpack.c.h.b16 %v1705
    %v1849 = vunpack.c.l.b16 %v1706
    %v1850 = vunpack.c.h.b16 %v1706
    %v1851 = vunpack.c.l.b16 %v1707
    %v1852 = vunpack.c.h.b16 %v1707
    %v1853 = vunpack.c.l.b16 %v1708
    %v1854 = vunpack.c.h.b16 %v1708
    %v1855 = vunpack.c.l.b16 %v1709
    %v1856 = vunpack.c.h.b16 %v1709
    %v1857 = vunpack.c.l.b16 %v1710
    %v1858 = vunpack.c.h.b16 %v1710
    %v1859 = vunpack.c.l.b16 %v1711
    %v1860 = vunpack.c.h.b16 %v1711
    %v1861 = vunpack.c.l.b16 %v1712
    %v1862 = vunpack.c.h.b16 %v1712
    %v1863 = vunpack.c.l.b16 %v1713
    %v1864 = vunpack.c.h.b16 %v1713
    %v1865 = vunpack.c.l.b16 %v1714
    %v1866 = vunpack.c.h.b16 %v1714
    %v1867 = vunpack.c.l.b16 %v1715
    %v1868 = vunpack.c.h.b16 %v1715
    %v1869 = vunpack.c.l.b16 %v1716
    %v1870 = vunpack.c.h.b16 %v1716
    %v1871 = vunpack.c.l.b16 %v1717
    %v1872 = vunpack.c.h.b16 %v1717
    %v1873 = vunpack.c.l.b16 %v1718
    %v1874 = vunpack.c.h.b16 %v1718
    %v1875 = vunpack.c.l.b16 %v1719
    %v1876 = vunpack.c.h.b16 %v1719
    %v1877 = vunpack.c.l.b16 %v1720
    %v1878 = vunpack.c.h.b16 %v1720
    %v1879 = vunpack.c.l.b16 %v1721
    %v1880 = vunpack.c.h.b16 %v1721
    %v1881 = vunpack.c.l.b16 %v1722
    %v1882 = vunpack.c.h.b16 %v1722
    %v1883 = vunpack.c.l.b16 %v1723
    %v1884 = vunpack.c.h.b16 %v1723
    %v1885 = vunpack.c.l.b16 %v1724
    %v1886 = vunpack.c.h.b16 %v1724
    %v1887 = vunpack.c.l.b16 %v1725
    %v1888 = vunpack.c.h.b16 %v1725
    %v1889 = vunpack.c.l.b16 %v1726
    %v1890 = vunpack.c.h.b16 %v1726
    %v1891 = vunpack.c.l.b16 %v1727
    %v1892 = vunpack.c.h.b16 %v1727
    %v1893 = vunpack.c.l.b16 %v1728
    %v1894 = vunpack.c.h.b16 %v1728
    %v1895 = vunpack.c.l.b16 %v1729
    %v1896 = vunpack.c.h.b16 %v1729
    %v1897 = vunpack.c.l.b16 %v1730
    %v1898 = vunpack.c.h.b16 %v1730
    %v1899 = vunpack.c.l.b16 %v1731
    %v1900 = vunpack.c.h.b16 %v1731
    %v1901 = vunpack.c.l.b16 %v1732
    %v1902 = vunpack.c.h.b16 %v1732
    %v1903 = vunpack.c.l.b16 %v1733
    %v1904 = vunpack.c.h.b16 %v1733
    %v1905 = vunpack.c.l.b16 %v1734
    %v1906 = vunpack.c.h.b16 %v1734
    %v1907 = vunpack.c.l.b16 %v1735
    %v1908 = vunpack.c.h.b16 %v1735
    %v1909 = vunpack.c.l.b16 %v1736
    %v1910 = vunpack.c.h.b16 %v1736
    %v1911 = vunpack.c.l.b16 %v1737
    %v1912 = vunpack.c.h.b16 %v1737
    %v1913 = vunpack.c.l.b16 %v1738
    %v1914 = vunpack.c.h.b16 %v1738
    %v1915 = vunpack.c.l.b16 %v1739
    %v1916 = vunpack.c.h.b16 %v1739
    %v1917 = vunpack.c.l.b16 %v1740
    %v1918 = vunpack.c.h.b16 %v1740
    %v1919 = vunpack.c.l.b16 %v1741
    %v1920 = vunpack.c.h.b16 %v1741
    %v1921 = vunpack.c.l.b16 %v1742
    %v1922 = vunpack.c.h.b16 %v1742
    %v1923 = vunpack.c.l.b16 %v1743
    %v1924 = vunpack.c.h.b16 %v1743
    %v1925 = vunpack.c.l.b16 %v1744
    %v1926 = vunpack.c.h.b16 %v1744
    %v1927 = vunpack.c.l.b16 %v1745
    %v1928 = vunpack.c.h.b16 %v1745
    %v1929 = vunpack.c.l.b16 %v1746
    %v1930 = vunpack.c.h.b16 %v1746
    %v1931 = vunpack.c.l.b16 %v1747
    %v1932 = vunpack.c.h.b16 %v1747
    %v1933 = vunpack.c.l.b16 %v1748
    %v1934 = vunpack.c.h.b16 %v1748
    %v1935 = vunpack.c.l.b16 %v1749
    %v1936 = vunpack.c.h.b16 %v1749
    %v1937 = vunpack.c.l.b16 %v1750
    %v1938 = vunpack.c.h.b16 %v1750
    %v1939 = vunpack.c.l.b16 %v1751
    %v1940 = vunpack.c.h.b16 %v1751
    %v1941 = vunpack.c.l.b16 %v1752
    %v1942 = vunpack.c.h.b16 %v1752
    %v1943 = vunpack.c.l.b16 %v1753
    %v1944 = vunpack.c.h.b16 %v1753
    %v1945 = vunpack.c.l.b16 %v1754
    %v1946 = vunpack.c.h.b16 %v1754
    %v1947 = vunpack.c.l.b16 %v1755
    %v1948 = vunpack.c.h.b16 %v1755
    %v1949 = vunpack.c.l.b16 %v1756
    %v1950 = vunpack.c.h.b16 %v1756
    %v1951 = vunpack.c.l.b16 %v1757
    %v1952 = vunpack.c.h.b16 %v1757
    %v1953 = vunpack.c.l.b16 %v1758
    %v1954 = vunpack.c.h.b16 %v1758
    %v1955 = vunpack.c.l.b16 %v1759
    %v1956 = vunpack.c.h.b16 %v1759
    %v1957 = vunpack.c.l.b16 %v1760
    %v1958 = vunpack.c.h.b16 %v1760
    %v1959 = vunpack.c.l.b16 %v1761
    %v1960 = vunpack.c.h.b16 %v1761
    %v1961 = vunpack.c.l.b16 %v1762
    %v1962 = vunpack.c.h.b16 %v1762
    %v1963 = vunpack.c.l.b16 %v1763
    %v1964 = vunpack.c.h.b16 %v1763
    %v1965 = vunpack.c.l.b16 %v1764
    %v1966 = vunpack.c.h.b16 %v1764
    %v1967 = vpack.c.b16 %v1843, %v1839
    %v1968 = vpack.c.b16 %v1844, %v1840
    %v1969 = vpack.c.b16 %v1845, %v1841
    %v1970 = vpack.c.b16 %v1846, %v1842
    %v1971 = vpack.c.b16 %v1851, %v1847
    %v1972 = vpack.c.b16 %v1852, %v1848
    %v1973 = vpack.c.b16 %v1853, %v1849
    %v1974 = vpack.c.b16 %v1854, %v1850
    %v1975 = vpack.c.b16 %v1859, %v1855
    %v1976 = vpack.c.b16 %v1860, %v1856
    %v1977 = vpack.c.b16 %v1861, %v1857
    %v1978 = vpack.c.b16 %v1862, %v1858
    %v1979 = vpack.c.b16 %v1867, %v1863
    %v1980 = vpack.c.b16 %v1868, %v1864
    %v1981 = vpack.c.b16 %v1869, %v1865
    %v1982 = vpack.c.b16 %v1870, %v1866
    %v1983 = vpack.c.b16 %v1875, %v1871
    %v1984 = vpack.c.b16 %v1876, %v1872
    %v1985 = vpack.c.b16 %v1877, %v1873
    %v1986 = vpack.c.b16 %v1878, %v1874
    %v1987 = vpack.c.b16 %v1883, %v1879
    %v1988 = vpack.c.b16 %v1884, %v1880
    %v1989 = vpack.c.b16 %v1885, %v1881
    %v1990 = vpack.c.b16 %v1886, %v1882
    %v1991 = vpack.c.b16 %v1891, %v1887
    %v1992 = vpack.c.b16 %v1892, %v1888
    %v1993 = vpack.c.b16 %v1893, %v1889
    %v1994 = vpack.c.b16 %v1894, %v1890
    %v1995 = vpack.c.b16 %v1899, %v1895
    %v1996 = vpack.c.b16 %v1900, %v1896
    %v1997 = vpack.c.b16 %v1901, %v1897
    %v1998 = vpack.c.b16 %v1902, %v1898
    %v1999 = vpack.c.b16 %v1907, %v1903
    %v2000 = vpack.c.b16 %v1908, %v1904
    %v2001 = vpack.c.b16 %v1909, %v1905
    %v2002 = vpack.c.b16 %v1910, %v1906
    %v2003 = vpack.c.b16 %v1915, %v1911
    %v2004 = vpack.c.b16 %v1916, %v1912
    %v2005 = vpack.c.b16 %v1917, %v1913
    %v2006 = vpack.c.b16 %v1918, %v1914
    %v2007 = vpack.c.b16 %v1923, %v1919
    %v2008 = vpack.c.b16 %v1924, %v1920
    %v2009 = vpack.c.b16 %v1925, %v1921
    %v2010 = vpack.c.b16 %v1926, %v1922
    %v2011 = vpack.c.b16 %v1931, %v1927
    %v2012 = vpack.c.b16 %v1932, %v1928
    %v2013 = vpack.c.b16 %v1933, %v1929
    %v2014 = vpack.c.b16 %v1934, %v1930
    %v2015 = vpack.c.b16 %v1939, %v1935
    %v2016 = vpack.c.b16 %v1940, %v1936
    %v2017 = vpack.c.b16 %v1941, %v1937
    %v2018 = vpack.c.b16 %v1942, %v1938
    %v2019 = vpack.c.b16 %v1947, %v1943
    %v2020 = vpack.c.b16 %v1948, %v1944
    %v2021 = vpack.c.b16 %v1949, %v1945
    %v2022 = vpack.c.b16 %v1950, %v1946
    %v2023 = vpack.c.b16 %v1955, %v1951
    %v2024 = vpack.c.b16 %v1956, %v1952
    %v2025 = vpack.c.b16 %v1957, %v1953
    %v2026 = vpack.c.b16 %v1958, %v1954
    %v2027 = vpack.c.b16 %v1963, %v1959
    %v2028 = vpack.c.b16 %v1964, %v1960
    %v2029 = vpack.c.b16 %v1965, %v1961
    %v2030 = vpack.c.b16 %v1966, %v1962
    %2095 = vmatpush.bf16.msra.mxu0 %v1995
    %2096 = vmatpush.bf16.msra.mxu0 %v1991
    %2097 = vmatpush.bf16.msra.mxu0 %v1987
    %2098 = vmatpush.bf16.msra.mxu0 %v1983
    %2099 = vmatpush.bf16.msra.mxu0 %v1979
    %2100 = vmatpush.bf16.msra.mxu0 %v1975
    %2101 = vmatpush.bf16.msra.mxu0 %v1971
    %2102 = vmatpush.bf16.msra.mxu0 %v1967
    %2103 = vmatmul.bf16.gmra.mxu0 %v1699
    %v2104 = vpop.f32.mrf.mxu0
    %v2105 = vadd.f32 %v1767, %v2104
    %v2106 = vpop.f32.mrf.mxu0
    %2107 = vdwg.mxu0
    %2108 = vmatpush.bf16.msra.mxu0 %v2027
    %2109 = vmatpush.bf16.msra.mxu0 %v2023
    %2110 = vmatpush.bf16.msra.mxu0 %v2019
    %2111 = vmatpush.bf16.msra.mxu0 %v2015
    %2112 = vmatpush.bf16.msra.mxu0 %v2011
    %2113 = vmatpush.bf16.msra.mxu0 %v2007
    %2114 = vmatpush.bf16.msra.mxu0 %v2003
    %2115 = vmatpush.bf16.msra.mxu0 %v1999
    %2116 = vmatmul.bf16.gmra.mxu0 %v1700
    %v2117 = vpop.f32.mrf.mxu0
    %v2118 = vadd.f32 %v2105, %v2117
    %v2119 = vpop.f32.mrf.mxu0
    %2120 = vdwg.mxu0
    %2121 = vmatpush.bf16.msra.mxu0 %v1996
    %2122 = vmatpush.bf16.msra.mxu0 %v1992
    %2123 = vmatpush.bf16.msra.mxu0 %v1988
    %2124 = vmatpush.bf16.msra.mxu0 %v1984
    %2125 = vmatpush.bf16.msra.mxu0 %v1980
    %2126 = vmatpush.bf16.msra.mxu0 %v1976
    %2127 = vmatpush.bf16.msra.mxu0 %v1972
    %2128 = vmatpush.bf16.msra.mxu0 %v1968
    %2129 = vmatmul.bf16.gmra.mxu0 %v1699
    %v2130 = vpop.f32.mrf.mxu0
    %v2131 = vadd.f32 %v1768, %v2130
    %v2132 = vpop.f32.mrf.mxu0
    %2133 = vdwg.mxu0
    %2134 = vmatpush.bf16.msra.mxu0 %v2028
    %2135 = vmatpush.bf16.msra.mxu0 %v2024
    %2136 = vmatpush.bf16.msra.mxu0 %v2020
    %2137 = vmatpush.bf16.msra.mxu0 %v2016
    %2138 = vmatpush.bf16.msra.mxu0 %v2012
    %2139 = vmatpush.bf16.msra.mxu0 %v2008
    %2140 = vmatpush.bf16.msra.mxu0 %v2004
    %2141 = vmatpush.bf16.msra.mxu0 %v2000
    %2142 = vmatmul.bf16.gmra.mxu0 %v1700
    %v2143 = vpop.f32.mrf.mxu0
    %v2144 = vadd.f32 %v2131, %v2143
    %v2145 = vpop.f32.mrf.mxu0
    %2146 = vdwg.mxu0
    %2147 = vmatpush.bf16.msra.mxu0 %v1997
    %2148 = vmatpush.bf16.msra.mxu0 %v1993
    %2149 = vmatpush.bf16.msra.mxu0 %v1989
    %2150 = vmatpush.bf16.msra.mxu0 %v1985
    %2151 = vmatpush.bf16.msra.mxu0 %v1981
    %2152 = vmatpush.bf16.msra.mxu0 %v1977
    %2153 = vmatpush.bf16.msra.mxu0 %v1973
    %2154 = vmatpush.bf16.msra.mxu0 %v1969
    %2155 = vmatmul.bf16.gmra.mxu0 %v1699
    %v2156 = vpop.f32.mrf.mxu0
    %v2157 = vadd.f32 %v1769, %v2156
    %v2158 = vpop.f32.mrf.mxu0
    %2159 = vdwg.mxu0
    %2160 = vmatpush.bf16.msra.mxu0 %v2029
    %2161 = vmatpush.bf16.msra.mxu0 %v2025
    %2162 = vmatpush.bf16.msra.mxu0 %v2021
    %2163 = vmatpush.bf16.msra.mxu0 %v2017
    %2164 = vmatpush.bf16.msra.mxu0 %v2013
    %2165 = vmatpush.bf16.msra.mxu0 %v2009
    %2166 = vmatpush.bf16.msra.mxu0 %v2005
    %2167 = vmatpush.bf16.msra.mxu0 %v2001
    %2168 = vmatmul.bf16.gmra.mxu0 %v1700
    %v2169 = vpop.f32.mrf.mxu0
    %v2170 = vadd.f32 %v2157, %v2169
    %v2171 = vpop.f32.mrf.mxu0
    %2172 = vdwg.mxu0
    %2173 = vmatpush.bf16.msra.mxu0 %v1998
    %2174 = vmatpush.bf16.msra.mxu0 %v1994
    %2175 = vmatpush.bf16.msra.mxu0 %v1990
    %2176 = vmatpush.bf16.msra.mxu0 %v1986
    %2177 = vmatpush.bf16.msra.mxu0 %v1982
    %2178 = vmatpush.bf16.msra.mxu0 %v1978
    %2179 = vmatpush.bf16.msra.mxu0 %v1974
    %2180 = vmatpush.bf16.msra.mxu0 %v1970
    %2181 = vmatmul.bf16.gmra.mxu0 %v1699
    %v2182 = vpop.f32.mrf.mxu0
    %v2183 = vadd.f32 %v1770, %v2182
    %v2184 = vpop.f32.mrf.mxu0
    %2185 = vdwg.mxu0
    %2186 = vmatpush.bf16.msra.mxu0 %v2030
    %2187 = vmatpush.bf16.msra.mxu0 %v2026
    %2188 = vmatpush.bf16.msra.mxu0 %v2022
    %2189 = vmatpush.bf16.msra.mxu0 %v2018
    %2190 = vmatpush.bf16.msra.mxu0 %v2014
    %2191 = vmatpush.bf16.msra.mxu0 %v2010
    %2192 = vmatpush.bf16.msra.mxu0 %v2006
    %2193 = vmatpush.bf16.msra.mxu0 %v2002
    %2194 = vmatmul.bf16.gmra.mxu0 %v1700
    %v2195 = vpop.f32.mrf.mxu0
    %v2196 = vadd.f32 %v2183, %v2195
    %v2197 = vpop.f32.mrf.mxu0
    %2198 = vdwg.mxu0
    %v2199 = vld [vmem:[%s1] sm:$0xff]
    %v2200 = vld [vmem:[%s1 + $0x8] sm:$0xff]
    %v2201 = vmul.f32 %v2170, 0.5
    %v2202 = vmul.f32 %v2196, 0.5
    %v2203 = vmul.f32 %v2201, 1.442695
    %v2204 = vpow.pop %v2203
    %v2205 = vmul.f32 %v2202, 1.442695
    %v2206 = vpow.pop %v2205
    %v2207 = vmul.f32 %v2199, %v2204
    %v2208 = vmul.f32 %v2200, %v2206
    %v2209 = vadd.f32 %v2118, %v2207
    %v2210 = vadd.f32 %v2144, %v2208
    %v2211 = vpack.c.bf16 %v2209, %v2209
    %v2212 = vpack.c.bf16 %v2210, %v2210
    %v2213 = vld [vmem:[#allocation8] sm:$0xff]
    %v2214 = vld [vmem:[#allocation8 + $0x8] sm:$0xff]
    %v2215 = vld [vmem:[#allocation8 + $0x10] sm:$0xff]
    %v2216 = vld [vmem:[#allocation8 + $0x18] sm:$0xff]
    %v2217 = vld [vmem:[#allocation8 + $0x20] sm:$0xff]
    %v2218 = vld [vmem:[#allocation8 + $0x28] sm:$0xff]
    %v2219 = vld [vmem:[#allocation8 + $0x30] sm:$0xff]
    %v2220 = vld [vmem:[#allocation8 + $0x38] sm:$0xff]
    %v2221 = vld [vmem:[#allocation8 + $0x40] sm:$0xff]
    %v2222 = vld [vmem:[#allocation8 + $0x48] sm:$0xff]
    %v2223 = vld [vmem:[#allocation8 + $0x50] sm:$0xff]
    %v2224 = vld [vmem:[#allocation8 + $0x58] sm:$0xff]
    %v2225 = vld [vmem:[#allocation8 + $0x60] sm:$0xff]
    %v2226 = vld [vmem:[#allocation8 + $0x68] sm:$0xff]
    %v2227 = vld [vmem:[#allocation8 + $0x70] sm:$0xff]
    %v2228 = vld [vmem:[#allocation8 + $0x78] sm:$0xff]
    %v2229 = vld [vmem:[#allocation8 + $0x80] sm:$0xff]
    %v2230 = vld [vmem:[#allocation8 + $0x88] sm:$0xff]
    %v2231 = vld [vmem:[#allocation8 + $0x90] sm:$0xff]
    %v2232 = vld [vmem:[#allocation8 + $0x98] sm:$0xff]
    %v2233 = vld [vmem:[#allocation8 + $0xa0] sm:$0xff]
    %v2234 = vld [vmem:[#allocation8 + $0xa8] sm:$0xff]
    %v2235 = vld [vmem:[#allocation8 + $0xb0] sm:$0xff]
    %v2236 = vld [vmem:[#allocation8 + $0xb8] sm:$0xff]
    %v2237 = vld [vmem:[#allocation8 + $0xc0] sm:$0xff]
    %v2238 = vld [vmem:[#allocation8 + $0xc8] sm:$0xff]
    %v2239 = vld [vmem:[#allocation8 + $0xd0] sm:$0xff]
    %v2240 = vld [vmem:[#allocation8 + $0xd8] sm:$0xff]
    %v2241 = vld [vmem:[#allocation8 + $0xe0] sm:$0xff]
    %v2242 = vld [vmem:[#allocation8 + $0xe8] sm:$0xff]
    %v2243 = vld [vmem:[#allocation8 + $0xf0] sm:$0xff]
    %v2244 = vld [vmem:[#allocation8 + $0xf8] sm:$0xff]
    %v2245 = vld [vmem:[#allocation8 + $0x100] sm:$0xff]
    %v2246 = vld [vmem:[#allocation8 + $0x108] sm:$0xff]
    %v2247 = vld [vmem:[#allocation8 + $0x110] sm:$0xff]
    %v2248 = vld [vmem:[#allocation8 + $0x118] sm:$0xff]
    %v2249 = vld [vmem:[#allocation8 + $0x120] sm:$0xff]
    %v2250 = vld [vmem:[#allocation8 + $0x128] sm:$0xff]
    %v2251 = vld [vmem:[#allocation8 + $0x130] sm:$0xff]
    %v2252 = vld [vmem:[#allocation8 + $0x138] sm:$0xff]
    %v2253 = vld [vmem:[#allocation8 + $0x140] sm:$0xff]
    %v2254 = vld [vmem:[#allocation8 + $0x148] sm:$0xff]
    %v2255 = vld [vmem:[#allocation8 + $0x150] sm:$0xff]
    %v2256 = vld [vmem:[#allocation8 + $0x158] sm:$0xff]
    %v2257 = vld [vmem:[#allocation8 + $0x160] sm:$0xff]
    %v2258 = vld [vmem:[#allocation8 + $0x168] sm:$0xff]
    %v2259 = vld [vmem:[#allocation8 + $0x170] sm:$0xff]
    %v2260 = vld [vmem:[#allocation8 + $0x178] sm:$0xff]
    %v2261 = vld [vmem:[#allocation8 + $0x180] sm:$0xff]
    %v2262 = vld [vmem:[#allocation8 + $0x188] sm:$0xff]
    %v2263 = vld [vmem:[#allocation8 + $0x190] sm:$0xff]
    %v2264 = vld [vmem:[#allocation8 + $0x198] sm:$0xff]
    %v2265 = vld [vmem:[#allocation8 + $0x1a0] sm:$0xff]
    %v2266 = vld [vmem:[#allocation8 + $0x1a8] sm:$0xff]
    %v2267 = vld [vmem:[#allocation8 + $0x1b0] sm:$0xff]
    %v2268 = vld [vmem:[#allocation8 + $0x1b8] sm:$0xff]
    %v2269 = vld [vmem:[#allocation8 + $0x1c0] sm:$0xff]
    %v2270 = vld [vmem:[#allocation8 + $0x1c8] sm:$0xff]
    %v2271 = vld [vmem:[#allocation8 + $0x1d0] sm:$0xff]
    %v2272 = vld [vmem:[#allocation8 + $0x1d8] sm:$0xff]
    %v2273 = vld [vmem:[#allocation8 + $0x1e0] sm:$0xff]
    %v2274 = vld [vmem:[#allocation8 + $0x1e8] sm:$0xff]
    %v2275 = vld [vmem:[#allocation8 + $0x1f0] sm:$0xff]
    %v2276 = vld [vmem:[#allocation8 + $0x1f8] sm:$0xff]
    %v2277 = vld [vmem:[#allocation8 + $0x200] sm:$0xff]
    %v2278 = vld [vmem:[#allocation8 + $0x208] sm:$0xff]
    %v2279 = vld [vmem:[#allocation8 + $0x210] sm:$0xff]
    %v2280 = vld [vmem:[#allocation8 + $0x218] sm:$0xff]
    %v2281 = vld [vmem:[#allocation8 + $0x220] sm:$0xff]
    %v2282 = vld [vmem:[#allocation8 + $0x228] sm:$0xff]
    %v2283 = vld [vmem:[#allocation8 + $0x230] sm:$0xff]
    %v2284 = vld [vmem:[#allocation8 + $0x238] sm:$0xff]
    %v2285 = vld [vmem:[#allocation8 + $0x240] sm:$0xff]
    %v2286 = vld [vmem:[#allocation8 + $0x248] sm:$0xff]
    %v2287 = vld [vmem:[#allocation8 + $0x250] sm:$0xff]
    %v2288 = vld [vmem:[#allocation8 + $0x258] sm:$0xff]
    %v2289 = vld [vmem:[#allocation8 + $0x260] sm:$0xff]
    %v2290 = vld [vmem:[#allocation8 + $0x268] sm:$0xff]
    %v2291 = vld [vmem:[#allocation8 + $0x270] sm:$0xff]
    %v2292 = vld [vmem:[#allocation8 + $0x278] sm:$0xff]
    %v2293 = vld [vmem:[#allocation8 + $0x280] sm:$0xff]
    %v2294 = vld [vmem:[#allocation8 + $0x288] sm:$0xff]
    %v2295 = vld [vmem:[#allocation8 + $0x290] sm:$0xff]
    %v2296 = vld [vmem:[#allocation8 + $0x298] sm:$0xff]
    %v2297 = vld [vmem:[#allocation8 + $0x2a0] sm:$0xff]
    %v2298 = vld [vmem:[#allocation8 + $0x2a8] sm:$0xff]
    %v2299 = vld [vmem:[#allocation8 + $0x2b0] sm:$0xff]
    %v2300 = vld [vmem:[#allocation8 + $0x2b8] sm:$0xff]
    %v2301 = vld [vmem:[#allocation8 + $0x2c0] sm:$0xff]
    %v2302 = vld [vmem:[#allocation8 + $0x2c8] sm:$0xff]
    %v2303 = vld [vmem:[#allocation8 + $0x2d0] sm:$0xff]
    %v2304 = vld [vmem:[#allocation8 + $0x2d8] sm:$0xff]
    %v2305 = vld [vmem:[#allocation8 + $0x2e0] sm:$0xff]
    %v2306 = vld [vmem:[#allocation8 + $0x2e8] sm:$0xff]
    %v2307 = vld [vmem:[#allocation8 + $0x2f0] sm:$0xff]
    %v2308 = vld [vmem:[#allocation8 + $0x2f8] sm:$0xff]
    %v2309 = vld [vmem:[%s9] sm:$0x3f]
    %v2311 = vperm.slane %v2309, 0
    %v2312 = vperm.slane %v2309, 1
    %v2313 = vperm.slane %v2309, 2
    %v2314 = vperm.slane %v2309, 3
    %v2315 = vperm.slane %v2309, 4
    %v2316 = vperm.slane %v2309, 5
    %v2419 = vunpack.c.l.b16 %v2213
    %v2420 = vunpack.c.h.b16 %v2213
    %v2421 = vunpack.c.l.b16 %v2214
    %v2422 = vunpack.c.h.b16 %v2214
    %v2423 = vunpack.c.l.b16 %v2215
    %v2424 = vunpack.c.h.b16 %v2215
    %v2425 = vunpack.c.l.b16 %v2216
    %v2426 = vunpack.c.h.b16 %v2216
    %v2427 = vunpack.c.l.b16 %v2217
    %v2428 = vunpack.c.h.b16 %v2217
    %v2429 = vunpack.c.l.b16 %v2218
    %v2430 = vunpack.c.h.b16 %v2218
    %v2431 = vunpack.c.l.b16 %v2219
    %v2432 = vunpack.c.h.b16 %v2219
    %v2433 = vunpack.c.l.b16 %v2220
    %v2434 = vunpack.c.h.b16 %v2220
    %v2435 = vunpack.c.l.b16 %v2221
    %v2436 = vunpack.c.h.b16 %v2221
    %v2437 = vunpack.c.l.b16 %v2222
    %v2438 = vunpack.c.h.b16 %v2222
    %v2439 = vunpack.c.l.b16 %v2223
    %v2440 = vunpack.c.h.b16 %v2223
    %v2441 = vunpack.c.l.b16 %v2224
    %v2442 = vunpack.c.h.b16 %v2224
    %v2443 = vunpack.c.l.b16 %v2225
    %v2444 = vunpack.c.h.b16 %v2225
    %v2445 = vunpack.c.l.b16 %v2226
    %v2446 = vunpack.c.h.b16 %v2226
    %v2447 = vunpack.c.l.b16 %v2227
    %v2448 = vunpack.c.h.b16 %v2227
    %v2449 = vunpack.c.l.b16 %v2228
    %v2450 = vunpack.c.h.b16 %v2228
    %v2451 = vunpack.c.l.b16 %v2229
    %v2452 = vunpack.c.h.b16 %v2229
    %v2453 = vunpack.c.l.b16 %v2230
    %v2454 = vunpack.c.h.b16 %v2230
    %v2455 = vunpack.c.l.b16 %v2231
    %v2456 = vunpack.c.h.b16 %v2231
    %v2457 = vunpack.c.l.b16 %v2232
    %v2458 = vunpack.c.h.b16 %v2232
    %v2459 = vunpack.c.l.b16 %v2233
    %v2460 = vunpack.c.h.b16 %v2233
    %v2461 = vunpack.c.l.b16 %v2234
    %v2462 = vunpack.c.h.b16 %v2234
    %v2463 = vunpack.c.l.b16 %v2235
    %v2464 = vunpack.c.h.b16 %v2235
    %v2465 = vunpack.c.l.b16 %v2236
    %v2466 = vunpack.c.h.b16 %v2236
    %v2467 = vunpack.c.l.b16 %v2237
    %v2468 = vunpack.c.h.b16 %v2237
    %v2469 = vunpack.c.l.b16 %v2238
    %v2470 = vunpack.c.h.b16 %v2238
    %v2471 = vunpack.c.l.b16 %v2239
    %v2472 = vunpack.c.h.b16 %v2239
    %v2473 = vunpack.c.l.b16 %v2240
    %v2474 = vunpack.c.h.b16 %v2240
    %v2475 = vunpack.c.l.b16 %v2241
    %v2476 = vunpack.c.h.b16 %v2241
    %v2477 = vunpack.c.l.b16 %v2242
    %v2478 = vunpack.c.h.b16 %v2242
    %v2479 = vunpack.c.l.b16 %v2243
    %v2480 = vunpack.c.h.b16 %v2243
    %v2481 = vunpack.c.l.b16 %v2244
    %v2482 = vunpack.c.h.b16 %v2244
    %v2483 = vunpack.c.l.b16 %v2245
    %v2484 = vunpack.c.h.b16 %v2245
    %v2485 = vunpack.c.l.b16 %v2246
    %v2486 = vunpack.c.h.b16 %v2246
    %v2487 = vunpack.c.l.b16 %v2247
    %v2488 = vunpack.c.h.b16 %v2247
    %v2489 = vunpack.c.l.b16 %v2248
    %v2490 = vunpack.c.h.b16 %v2248
    %v2491 = vunpack.c.l.b16 %v2249
    %v2492 = vunpack.c.h.b16 %v2249
    %v2493 = vunpack.c.l.b16 %v2250
    %v2494 = vunpack.c.h.b16 %v2250
    %v2495 = vunpack.c.l.b16 %v2251
    %v2496 = vunpack.c.h.b16 %v2251
    %v2497 = vunpack.c.l.b16 %v2252
    %v2498 = vunpack.c.h.b16 %v2252
    %v2499 = vunpack.c.l.b16 %v2253
    %v2500 = vunpack.c.h.b16 %v2253
    %v2501 = vunpack.c.l.b16 %v2254
    %v2502 = vunpack.c.h.b16 %v2254
    %v2503 = vunpack.c.l.b16 %v2255
    %v2504 = vunpack.c.h.b16 %v2255
    %v2505 = vunpack.c.l.b16 %v2256
    %v2506 = vunpack.c.h.b16 %v2256
    %v2507 = vunpack.c.l.b16 %v2257
    %v2508 = vunpack.c.h.b16 %v2257
    %v2509 = vunpack.c.l.b16 %v2258
    %v2510 = vunpack.c.h.b16 %v2258
    %v2511 = vunpack.c.l.b16 %v2259
    %v2512 = vunpack.c.h.b16 %v2259
    %v2513 = vunpack.c.l.b16 %v2260
    %v2514 = vunpack.c.h.b16 %v2260
    %v2515 = vunpack.c.l.b16 %v2261
    %v2516 = vunpack.c.h.b16 %v2261
    %v2517 = vunpack.c.l.b16 %v2262
    %v2518 = vunpack.c.h.b16 %v2262
    %v2519 = vunpack.c.l.b16 %v2263
    %v2520 = vunpack.c.h.b16 %v2263
    %v2521 = vunpack.c.l.b16 %v2264
    %v2522 = vunpack.c.h.b16 %v2264
    %v2523 = vunpack.c.l.b16 %v2265
    %v2524 = vunpack.c.h.b16 %v2265
    %v2525 = vunpack.c.l.b16 %v2266
    %v2526 = vunpack.c.h.b16 %v2266
    %v2527 = vunpack.c.l.b16 %v2267
    %v2528 = vunpack.c.h.b16 %v2267
    %v2529 = vunpack.c.l.b16 %v2268
    %v2530 = vunpack.c.h.b16 %v2268
    %v2531 = vunpack.c.l.b16 %v2269
    %v2532 = vunpack.c.h.b16 %v2269
    %v2533 = vunpack.c.l.b16 %v2270
    %v2534 = vunpack.c.h.b16 %v2270
    %v2535 = vunpack.c.l.b16 %v2271
    %v2536 = vunpack.c.h.b16 %v2271
    %v2537 = vunpack.c.l.b16 %v2272
    %v2538 = vunpack.c.h.b16 %v2272
    %v2539 = vunpack.c.l.b16 %v2273
    %v2540 = vunpack.c.h.b16 %v2273
    %v2541 = vunpack.c.l.b16 %v2274
    %v2542 = vunpack.c.h.b16 %v2274
    %v2543 = vunpack.c.l.b16 %v2275
    %v2544 = vunpack.c.h.b16 %v2275
    %v2545 = vunpack.c.l.b16 %v2276
    %v2546 = vunpack.c.h.b16 %v2276
    %v2547 = vunpack.c.l.b16 %v2277
    %v2548 = vunpack.c.h.b16 %v2277
    %v2549 = vunpack.c.l.b16 %v2278
    %v2550 = vunpack.c.h.b16 %v2278
    %v2551 = vunpack.c.l.b16 %v2279
    %v2552 = vunpack.c.h.b16 %v2279
    %v2553 = vunpack.c.l.b16 %v2280
    %v2554 = vunpack.c.h.b16 %v2280
    %v2555 = vunpack.c.l.b16 %v2281
    %v2556 = vunpack.c.h.b16 %v2281
    %v2557 = vunpack.c.l.b16 %v2282
    %v2558 = vunpack.c.h.b16 %v2282
    %v2559 = vunpack.c.l.b16 %v2283
    %v2560 = vunpack.c.h.b16 %v2283
    %v2561 = vunpack.c.l.b16 %v2284
    %v2562 = vunpack.c.h.b16 %v2284
    %v2563 = vunpack.c.l.b16 %v2285
    %v2564 = vunpack.c.h.b16 %v2285
    %v2565 = vunpack.c.l.b16 %v2286
    %v2566 = vunpack.c.h.b16 %v2286
    %v2567 = vunpack.c.l.b16 %v2287
    %v2568 = vunpack.c.h.b16 %v2287
    %v2569 = vunpack.c.l.b16 %v2288
    %v2570 = vunpack.c.h.b16 %v2288
    %v2571 = vunpack.c.l.b16 %v2289
    %v2572 = vunpack.c.h.b16 %v2289
    %v2573 = vunpack.c.l.b16 %v2290
    %v2574 = vunpack.c.h.b16 %v2290
    %v2575 = vunpack.c.l.b16 %v2291
    %v2576 = vunpack.c.h.b16 %v2291
    %v2577 = vunpack.c.l.b16 %v2292
    %v2578 = vunpack.c.h.b16 %v2292
    %v2579 = vunpack.c.l.b16 %v2293
    %v2580 = vunpack.c.h.b16 %v2293
    %v2581 = vunpack.c.l.b16 %v2294
    %v2582 = vunpack.c.h.b16 %v2294
    %v2583 = vunpack.c.l.b16 %v2295
    %v2584 = vunpack.c.h.b16 %v2295
    %v2585 = vunpack.c.l.b16 %v2296
    %v2586 = vunpack.c.h.b16 %v2296
    %v2587 = vunpack.c.l.b16 %v2297
    %v2588 = vunpack.c.h.b16 %v2297
    %v2589 = vunpack.c.l.b16 %v2298
    %v2590 = vunpack.c.h.b16 %v2298
    %v2591 = vunpack.c.l.b16 %v2299
    %v2592 = vunpack.c.h.b16 %v2299
    %v2593 = vunpack.c.l.b16 %v2300
    %v2594 = vunpack.c.h.b16 %v2300
    %v2595 = vunpack.c.l.b16 %v2301
    %v2596 = vunpack.c.h.b16 %v2301
    %v2597 = vunpack.c.l.b16 %v2302
    %v2598 = vunpack.c.h.b16 %v2302
    %v2599 = vunpack.c.l.b16 %v2303
    %v2600 = vunpack.c.h.b16 %v2303
    %v2601 = vunpack.c.l.b16 %v2304
    %v2602 = vunpack.c.h.b16 %v2304
    %v2603 = vunpack.c.l.b16 %v2305
    %v2604 = vunpack.c.h.b16 %v2305
    %v2605 = vunpack.c.l.b16 %v2306
    %v2606 = vunpack.c.h.b16 %v2306
    %v2607 = vunpack.c.l.b16 %v2307
    %v2608 = vunpack.c.h.b16 %v2307
    %v2609 = vunpack.c.l.b16 %v2308
    %v2610 = vunpack.c.h.b16 %v2308
    %v2611 = vpack.c.b16 %v2425, %v2419
    %v2612 = vpack.c.b16 %v2426, %v2420
    %v2613 = vpack.c.b16 %v2427, %v2421
    %v2614 = vpack.c.b16 %v2428, %v2422
    %v2615 = vpack.c.b16 %v2429, %v2423
    %v2616 = vpack.c.b16 %v2430, %v2424
    %v2617 = vpack.c.b16 %v2437, %v2431
    %v2618 = vpack.c.b16 %v2438, %v2432
    %v2619 = vpack.c.b16 %v2439, %v2433
    %v2620 = vpack.c.b16 %v2440, %v2434
    %v2621 = vpack.c.b16 %v2441, %v2435
    %v2622 = vpack.c.b16 %v2442, %v2436
    %v2623 = vpack.c.b16 %v2449, %v2443
    %v2624 = vpack.c.b16 %v2450, %v2444
    %v2625 = vpack.c.b16 %v2451, %v2445
    %v2626 = vpack.c.b16 %v2452, %v2446
    %v2627 = vpack.c.b16 %v2453, %v2447
    %v2628 = vpack.c.b16 %v2454, %v2448
    %v2629 = vpack.c.b16 %v2461, %v2455
    %v2630 = vpack.c.b16 %v2462, %v2456
    %v2631 = vpack.c.b16 %v2463, %v2457
    %v2632 = vpack.c.b16 %v2464, %v2458
    %v2633 = vpack.c.b16 %v2465, %v2459
    %v2634 = vpack.c.b16 %v2466, %v2460
    %v2635 = vpack.c.b16 %v2473, %v2467
    %v2636 = vpack.c.b16 %v2474, %v2468
    %v2637 = vpack.c.b16 %v2475, %v2469
    %v2638 = vpack.c.b16 %v2476, %v2470
    %v2639 = vpack.c.b16 %v2477, %v2471
    %v2640 = vpack.c.b16 %v2478, %v2472
    %v2641 = vpack.c.b16 %v2485, %v2479
    %v2642 = vpack.c.b16 %v2486, %v2480
    %v2643 = vpack.c.b16 %v2487, %v2481
    %v2644 = vpack.c.b16 %v2488, %v2482
    %v2645 = vpack.c.b16 %v2489, %v2483
    %v2646 = vpack.c.b16 %v2490, %v2484
    %v2647 = vpack.c.b16 %v2497, %v2491
    %v2648 = vpack.c.b16 %v2498, %v2492
    %v2649 = vpack.c.b16 %v2499, %v2493
    %v2650 = vpack.c.b16 %v2500, %v2494
    %v2651 = vpack.c.b16 %v2501, %v2495
    %v2652 = vpack.c.b16 %v2502, %v2496
    %v2653 = vpack.c.b16 %v2509, %v2503
    %v2654 = vpack.c.b16 %v2510, %v2504
    %v2655 = vpack.c.b16 %v2511, %v2505
    %v2656 = vpack.c.b16 %v2512, %v2506
    %v2657 = vpack.c.b16 %v2513, %v2507
    %v2658 = vpack.c.b16 %v2514, %v2508
    %v2659 = vpack.c.b16 %v2521, %v2515
    %v2660 = vpack.c.b16 %v2522, %v2516
    %v2661 = vpack.c.b16 %v2523, %v2517
    %v2662 = vpack.c.b16 %v2524, %v2518
    %v2663 = vpack.c.b16 %v2525, %v2519
    %v2664 = vpack.c.b16 %v2526, %v2520
    %v2665 = vpack.c.b16 %v2533, %v2527
    %v2666 = vpack.c.b16 %v2534, %v2528
    %v2667 = vpack.c.b16 %v2535, %v2529
    %v2668 = vpack.c.b16 %v2536, %v2530
    %v2669 = vpack.c.b16 %v2537, %v2531
    %v2670 = vpack.c.b16 %v2538, %v2532
    %v2671 = vpack.c.b16 %v2545, %v2539
    %v2672 = vpack.c.b16 %v2546, %v2540
    %v2673 = vpack.c.b16 %v2547, %v2541
    %v2674 = vpack.c.b16 %v2548, %v2542
    %v2675 = vpack.c.b16 %v2549, %v2543
    %v2676 = vpack.c.b16 %v2550, %v2544
    %v2677 = vpack.c.b16 %v2557, %v2551
    %v2678 = vpack.c.b16 %v2558, %v2552
    %v2679 = vpack.c.b16 %v2559, %v2553
    %v2680 = vpack.c.b16 %v2560, %v2554
    %v2681 = vpack.c.b16 %v2561, %v2555
    %v2682 = vpack.c.b16 %v2562, %v2556
    %v2683 = vpack.c.b16 %v2569, %v2563
    %v2684 = vpack.c.b16 %v2570, %v2564
    %v2685 = vpack.c.b16 %v2571, %v2565
    %v2686 = vpack.c.b16 %v2572, %v2566
    %v2687 = vpack.c.b16 %v2573, %v2567
    %v2688 = vpack.c.b16 %v2574, %v2568
    %v2689 = vpack.c.b16 %v2581, %v2575
    %v2690 = vpack.c.b16 %v2582, %v2576
    %v2691 = vpack.c.b16 %v2583, %v2577
    %v2692 = vpack.c.b16 %v2584, %v2578
    %v2693 = vpack.c.b16 %v2585, %v2579
    %v2694 = vpack.c.b16 %v2586, %v2580
    %v2695 = vpack.c.b16 %v2593, %v2587
    %v2696 = vpack.c.b16 %v2594, %v2588
    %v2697 = vpack.c.b16 %v2595, %v2589
    %v2698 = vpack.c.b16 %v2596, %v2590
    %v2699 = vpack.c.b16 %v2597, %v2591
    %v2700 = vpack.c.b16 %v2598, %v2592
    %v2701 = vpack.c.b16 %v2605, %v2599
    %v2702 = vpack.c.b16 %v2606, %v2600
    %v2703 = vpack.c.b16 %v2607, %v2601
    %v2704 = vpack.c.b16 %v2608, %v2602
    %v2705 = vpack.c.b16 %v2609, %v2603
    %v2706 = vpack.c.b16 %v2610, %v2604
    %2803 = vmatpush.bf16.msra.mxu0 %v2653
    %2804 = vmatpush.bf16.msra.mxu0 %v2647
    %2805 = vmatpush.bf16.msra.mxu0 %v2641
    %2806 = vmatpush.bf16.msra.mxu0 %v2635
    %2807 = vmatpush.bf16.msra.mxu0 %v2629
    %2808 = vmatpush.bf16.msra.mxu0 %v2623
    %2809 = vmatpush.bf16.msra.mxu0 %v2617
    %2810 = vmatpush.bf16.msra.mxu0 %v2611
    %2811 = vmatmul.bf16.gmra.mxu0 %v2211
    %v2812 = vpop.f32.mrf.mxu0
    %v2813 = vadd.f32 %v2311, %v2812
    %v2814 = vpop.f32.mrf.mxu0
    %2815 = vdwg.mxu0
    %2816 = vmatpush.bf16.msra.mxu0 %v2701
    %2817 = vmatpush.bf16.msra.mxu0 %v2695
    %2818 = vmatpush.bf16.msra.mxu0 %v2689
    %2819 = vmatpush.bf16.msra.mxu0 %v2683
    %2820 = vmatpush.bf16.msra.mxu0 %v2677
    %2821 = vmatpush.bf16.msra.mxu0 %v2671
    %2822 = vmatpush.bf16.msra.mxu0 %v2665
    %2823 = vmatpush.bf16.msra.mxu0 %v2659
    %2824 = vmatmul.bf16.gmra.mxu0 %v2212
    %v2825 = vpop.f32.mrf.mxu0
    %v2826 = vadd.f32 %v2813, %v2825
    %v2827 = vpop.f32.mrf.mxu0
    %2828 = vdwg.mxu0
    %2829 = vmatpush.bf16.msra.mxu0 %v2654
    %2830 = vmatpush.bf16.msra.mxu0 %v2648
    %2831 = vmatpush.bf16.msra.mxu0 %v2642
    %2832 = vmatpush.bf16.msra.mxu0 %v2636
    %2833 = vmatpush.bf16.msra.mxu0 %v2630
    %2834 = vmatpush.bf16.msra.mxu0 %v2624
    %2835 = vmatpush.bf16.msra.mxu0 %v2618
    %2836 = vmatpush.bf16.msra.mxu0 %v2612
    %2837 = vmatmul.bf16.gmra.mxu0 %v2211
    %v2838 = vpop.f32.mrf.mxu0
    %v2839 = vadd.f32 %v2312, %v2838
    %v2840 = vpop.f32.mrf.mxu0
    %2841 = vdwg.mxu0
    %2842 = vmatpush.bf16.msra.mxu0 %v2702
    %2843 = vmatpush.bf16.msra.mxu0 %v2696
    %2844 = vmatpush.bf16.msra.mxu0 %v2690
    %2845 = vmatpush.bf16.msra.mxu0 %v2684
    %2846 = vmatpush.bf16.msra.mxu0 %v2678
    %2847 = vmatpush.bf16.msra.mxu0 %v2672
    %2848 = vmatpush.bf16.msra.mxu0 %v2666
    %2849 = vmatpush.bf16.msra.mxu0 %v2660
    %2850 = vmatmul.bf16.gmra.mxu0 %v2212
    %v2851 = vpop.f32.mrf.mxu0
    %v2852 = vadd.f32 %v2839, %v2851
    %v2853 = vpop.f32.mrf.mxu0
    %2854 = vdwg.mxu0
    %2855 = vmatpush.bf16.msra.mxu0 %v2655
    %2856 = vmatpush.bf16.msra.mxu0 %v2649
    %2857 = vmatpush.bf16.msra.mxu0 %v2643
    %2858 = vmatpush.bf16.msra.mxu0 %v2637
    %2859 = vmatpush.bf16.msra.mxu0 %v2631
    %2860 = vmatpush.bf16.msra.mxu0 %v2625
    %2861 = vmatpush.bf16.msra.mxu0 %v2619
    %2862 = vmatpush.bf16.msra.mxu0 %v2613
    %2863 = vmatmul.bf16.gmra.mxu0 %v2211
    %v2864 = vpop.f32.mrf.mxu0
    %v2865 = vadd.f32 %v2313, %v2864
    %v2866 = vpop.f32.mrf.mxu0
    %2867 = vdwg.mxu0
    %2868 = vmatpush.bf16.msra.mxu0 %v2703
    %2869 = vmatpush.bf16.msra.mxu0 %v2697
    %2870 = vmatpush.bf16.msra.mxu0 %v2691
    %2871 = vmatpush.bf16.msra.mxu0 %v2685
    %2872 = vmatpush.bf16.msra.mxu0 %v2679
    %2873 = vmatpush.bf16.msra.mxu0 %v2673
    %2874 = vmatpush.bf16.msra.mxu0 %v2667
    %2875 = vmatpush.bf16.msra.mxu0 %v2661
    %2876 = vmatmul.bf16.gmra.mxu0 %v2212
    %v2877 = vpop.f32.mrf.mxu0
    %v2878 = vadd.f32 %v2865, %v2877
    %v2879 = vpop.f32.mrf.mxu0
    %2880 = vdwg.mxu0
    %2881 = vmatpush.bf16.msra.mxu0 %v2656
    %2882 = vmatpush.bf16.msra.mxu0 %v2650
    %2883 = vmatpush.bf16.msra.mxu0 %v2644
    %2884 = vmatpush.bf16.msra.mxu0 %v2638
    %2885 = vmatpush.bf16.msra.mxu0 %v2632
    %2886 = vmatpush.bf16.msra.mxu0 %v2626
    %2887 = vmatpush.bf16.msra.mxu0 %v2620
    %2888 = vmatpush.bf16.msra.mxu0 %v2614
    %2889 = vmatmul.bf16.gmra.mxu0 %v2211
    %v2890 = vpop.f32.mrf.mxu0
    %v2891 = vadd.f32 %v2314, %v2890
    %v2892 = vpop.f32.mrf.mxu0
    %2893 = vdwg.mxu0
    %2894 = vmatpush.bf16.msra.mxu0 %v2704
    %2895 = vmatpush.bf16.msra.mxu0 %v2698
    %2896 = vmatpush.bf16.msra.mxu0 %v2692
    %2897 = vmatpush.bf16.msra.mxu0 %v2686
    %2898 = vmatpush.bf16.msra.mxu0 %v2680
    %2899 = vmatpush.bf16.msra.mxu0 %v2674
    %2900 = vmatpush.bf16.msra.mxu0 %v2668
    %2901 = vmatpush.bf16.msra.mxu0 %v2662
    %2902 = vmatmul.bf16.gmra.mxu0 %v2212
    %v2903 = vpop.f32.mrf.mxu0
    %v2904 = vadd.f32 %v2891, %v2903
    %v2905 = vpop.f32.mrf.mxu0
    %2906 = vdwg.mxu0
    %2907 = vmatpush.bf16.msra.mxu0 %v2657
    %2908 = vmatpush.bf16.msra.mxu0 %v2651
    %2909 = vmatpush.bf16.msra.mxu0 %v2645
    %2910 = vmatpush.bf16.msra.mxu0 %v2639
    %2911 = vmatpush.bf16.msra.mxu0 %v2633
    %2912 = vmatpush.bf16.msra.mxu0 %v2627
    %2913 = vmatpush.bf16.msra.mxu0 %v2621
    %2914 = vmatpush.bf16.msra.mxu0 %v2615
    %2915 = vmatmul.bf16.gmra.mxu0 %v2211
    %v2916 = vpop.f32.mrf.mxu0
    %v2917 = vadd.f32 %v2315, %v2916
    %v2918 = vpop.f32.mrf.mxu0
    %2919 = vdwg.mxu0
    %2920 = vmatpush.bf16.msra.mxu0 %v2705
    %2921 = vmatpush.bf16.msra.mxu0 %v2699
    %2922 = vmatpush.bf16.msra.mxu0 %v2693
    %2923 = vmatpush.bf16.msra.mxu0 %v2687
    %2924 = vmatpush.bf16.msra.mxu0 %v2681
    %2925 = vmatpush.bf16.msra.mxu0 %v2675
    %2926 = vmatpush.bf16.msra.mxu0 %v2669
    %2927 = vmatpush.bf16.msra.mxu0 %v2663
    %2928 = vmatmul.bf16.gmra.mxu0 %v2212
    %v2929 = vpop.f32.mrf.mxu0
    %v2930 = vadd.f32 %v2917, %v2929
    %v2931 = vpop.f32.mrf.mxu0
    %2932 = vdwg.mxu0
    %2933 = vmatpush.bf16.msra.mxu0 %v2658
    %2934 = vmatpush.bf16.msra.mxu0 %v2652
    %2935 = vmatpush.bf16.msra.mxu0 %v2646
    %2936 = vmatpush.bf16.msra.mxu0 %v2640
    %2937 = vmatpush.bf16.msra.mxu0 %v2634
    %2938 = vmatpush.bf16.msra.mxu0 %v2628
    %2939 = vmatpush.bf16.msra.mxu0 %v2622
    %2940 = vmatpush.bf16.msra.mxu0 %v2616
    %2941 = vmatmul.bf16.gmra.mxu0 %v2211
    %v2942 = vpop.f32.mrf.mxu0
    %v2943 = vadd.f32 %v2316, %v2942
    %v2944 = vpop.f32.mrf.mxu0
    %2945 = vdwg.mxu0
    %2946 = vmatpush.bf16.msra.mxu0 %v2706
    %2947 = vmatpush.bf16.msra.mxu0 %v2700
    %2948 = vmatpush.bf16.msra.mxu0 %v2694
    %2949 = vmatpush.bf16.msra.mxu0 %v2688
    %2950 = vmatpush.bf16.msra.mxu0 %v2682
    %2951 = vmatpush.bf16.msra.mxu0 %v2676
    %2952 = vmatpush.bf16.msra.mxu0 %v2670
    %2953 = vmatpush.bf16.msra.mxu0 %v2664
    %2954 = vmatmul.bf16.gmra.mxu0 %v2212
    %v2955 = vpop.f32.mrf.mxu0
    %v2956 = vadd.f32 %v2943, %v2955
    %v2957 = vpop.f32.mrf.mxu0
    %2958 = vdwg.mxu0
    %v2959 = vtanh.pop %v2826
    %v2960 = vtanh.pop %v2852
    %v2961 = vtanh.pop %v2878
    %v2962 = vtanh.pop %v2904
    %v2963 = vtanh.pop %v2930
    %v2964 = vtanh.pop %v2956
    %2965 = vst [vmem:[#allocation10] sm:$0xff] %v2959
    %2966 = vst [vmem:[#allocation10 + $0x8] sm:$0xff] %v2960
    %2967 = vst [vmem:[#allocation10 + $0x10] sm:$0xff] %v2961
    %2968 = vst [vmem:[#allocation10 + $0x18] sm:$0xff] %v2962
    %2969 = vst [vmem:[#allocation10 + $0x20] sm:$0xff] %v2963
    %2970 = vst [vmem:[#allocation10 + $0x28] sm:$0xff] %v2964
    %2971 = vst [vmem:[%s11] sm:$0xff] %v2118
    %2972 = vst [vmem:[%s11 + $0x8] sm:$0xff] %v2144
    %2973 = vst [vmem:[%s11 + $0x10] sm:$0xff] %v2170
    %2974 = vst [vmem:[%s11 + $0x18] sm:$0xff] %v2196
    // Predicated region
    $region58: #{_forward_impl.1} parent=1 // pred_check
      _
    $region59: #{_forward_impl.1} parent=1 // pred_check_branch
      %2976 = sbr.rel (0) target = $region61
    $region60: #{_forward_impl.1} parent=1 // pred_region
      %2978 = vsyncadd [#allocation4], 0
      %s2980 = sshll.u32 [#allocation10], 4
      %s2981 = int_to_ptr.vmem [resolvable:$true] %s2980
      %s2982 = sshll.u32 %s10, 4
      %s2983 = int_to_ptr.hbm [resolvable:$true] %s2982
      %2985 = dma.vmem_to_hbm [thread:$0]  %s2981, 768, %s2983, [#allocation4]
    $region61: #{_forward_impl.1} parent=1 // pred_fallthru
      _
    // Predicated region
    $region62: #{_forward_impl.1} parent=1 // pred_check
      _
    $region63: #{_forward_impl.1} parent=1 // pred_check_branch
      %2987 = sbr.rel (0) target = $region65
    $region64: #{_forward_impl.1} parent=1 // pred_region
      _
    $region65: #{_forward_impl.1} parent=1 // pred_fallthru
      _
    // Predicated region
    $region66: #{_forward_impl.1} parent=1 // pred_check
      _
    $region67: #{_forward_impl.1} parent=1 // pred_check_branch
      %2989 = sbr.rel (0) target = $region69
    $region68: #{_forward_impl.1} parent=1 // pred_region
      %2991 = dma.done [#allocation4], 768
    $region69: #{_forward_impl.1} parent=1 // pred_fallthru
      _
    // Predicated region
    $region70: #{_forward_impl.1} parent=1 // pred_check
      _
    $region71: #{_forward_impl.1} parent=1 // pred_check_branch
      %2993 = sbr.rel (0) target = $region73
    $region72: #{_forward_impl.1} parent=1 // pred_region
      _
    $region73: #{_forward_impl.1} parent=1 // pred_fallthru
      _
    %2994 = vsyncpa [#allocation3], 1
    %2995 = vsyncpa [#allocation6], 1
    %2996 = vsyncpa [#allocation9], 1
    %2997 = vsyncpa [#allocation4], 1

</llo_original>
